<compile_context>
chip_gen: v7x
topology: tpu7x:2x2x1
jax: 0.10.0
libtpu: 0.0.40
codegen_flags: <defaults>
</compile_context>

<pallas_src>
import numpy as np
import jax
import jax.numpy as jnp
from jax import lax
from jax.experimental import pallas as pl
from jax.experimental.pallas import tpu as pltpu


# --------------------------------------------------------------------------
# Fused Pallas kernel (whole network)
# --------------------------------------------------------------------------
_REFS_PER_BLOCK = 11  # coefs, betta, Wg, bg, W1a, W1b, b1, W2, b2, W3, b3


def _make_tide_net_kernel(n_block):
    def kernel(*refs):
        (x_in_ref, evecs_ref, a_ref, fw_ref, fb_ref, lw_ref, lb_ref) = refs[:7]
        blk = refs[7:-1]
        o_ref = refs[-1]
        f32 = jnp.float32

        evecs = evecs_ref[...]          # [V, K]  (loaded once, reused every block)
        a_norm = a_ref[...]             # [V, V]

        # first_lin
        x = jnp.dot(x_in_ref[...], fw_ref[...], preferred_element_type=f32) + fb_ref[...]

        for b in range(n_block):
            (coefs_ref, betta_ref, wg_ref, bg_ref,
             w1a_ref, w1b_ref, b1_ref,
             w2_ref, b2_ref, w3_ref, b3_ref) = blk[b * _REFS_PER_BLOCK:(b + 1) * _REFS_PER_BLOCK]

            # --- spectral diffusion (Time_derivative_diffusion, 'spectral') ---
            # x_spec = evecs.T @ x  without a separate transposed input.
            x_spec = lax.dot_general(
                evecs, x, (((0,), (0,)), ((), ())),
                preferred_element_type=f32)                         # [K, Cp]
            x_ds = coefs_ref[...] * x_spec                          # (coefs - alpha) pre-folded
            x_diffuse = (jnp.dot(evecs, x_ds, preferred_element_type=f32)
                         + betta_ref[0, 0] * x)                     # [V, Cp]

            # --- GCNConv (dense normalized adjacency) + ReLU ---
            xw = jnp.dot(x_diffuse, wg_ref[...], preferred_element_type=f32)
            h = jnp.maximum(
                jnp.dot(a_norm, xw, preferred_element_type=f32) + bg_ref[...], 0.0)

            # --- MiniMLP on concat(x, h); W1 pre-split so no in-kernel concat ---
            z = jnp.maximum(
                jnp.dot(x, w1a_ref[...], preferred_element_type=f32)
                + jnp.dot(h, w1b_ref[...], preferred_element_type=f32)
                + b1_ref[...], 0.0)
            z = jnp.maximum(
                jnp.dot(z, w2_ref[...], preferred_element_type=f32) + b2_ref[...], 0.0)
            z = jnp.dot(z, w3_ref[...], preferred_element_type=f32) + b3_ref[...]

            # residual
            x = z + x

        # last_lin (last_activation is None by default -> no-op)
        o_ref[...] = jnp.dot(x, lw_ref[...], preferred_element_type=f32) + lb_ref[...]

    return kernel


# --------------------------------------------------------------------------
# Wrapper: pad channels to a lane-dense width, precompute coefs, single call.
# --------------------------------------------------------------------------
def _round_up(n, m):
    return ((n + m - 1) // m) * m


@jax.jit
def tide_net_forward(params, x_in, evecs, evals, a_norm):
    V, C_in = x_in.shape
    C_width = params["first_w"].shape[1]
    C_out = params["last_w"].shape[1]
    n_block = len(params["blocks"])

    # Lane-dense (>=128) padded channel widths; padded channels stay exactly 0
    # through the whole network because all padded weight rows/cols and biases
    # are zero, so numerics are unchanged.
    CP = _round_up(max(C_width, 128), 128)
    COP = _round_up(max(C_out, 128), 128)

    def pad2(w, rows, cols):
        return jnp.pad(w, ((0, rows - w.shape[0]), (0, cols - w.shape[1])))

    def pad_bias(b, cols):
        return jnp.pad(b.reshape(1, -1), ((0, 0), (0, cols - b.shape[0])))

    args = [
        x_in, evecs, a_norm,
        pad2(params["first_w"], C_in, CP), pad_bias(params["first_b"], CP),
        pad2(params["last_w"], CP, COP), pad_bias(params["last_b"], COP),
    ]
    vmem = pl.BlockSpec(memory_space=pltpu.MemorySpace.VMEM)
    smem = pl.BlockSpec(memory_space=pltpu.MemorySpace.SMEM)
    in_specs = [vmem] * 7

    for bp in params["blocks"]:
        # parameter-only: precompute (exp(-evals*t) - alpha) once, outside kernel
        coefs = jnp.exp(-evals[:, None] * bp["diffusion_time"][None, :]) - bp["alpha"]
        coefs = jnp.pad(coefs, ((0, 0), (0, CP - C_width)))
        args += [
            coefs,
            bp["betta"].reshape(1, 1),
            pad2(bp["w_gcn"], CP, CP), pad_bias(bp["b_gcn"], CP),
            pad2(bp["w1"][:C_width], CP, CP), pad2(bp["w1"][C_width:], CP, CP),
            pad_bias(bp["b1"], CP),
            pad2(bp["w2"], CP, CP), pad_bias(bp["b2"], CP),
            pad2(bp["w3"], CP, CP), pad_bias(bp["b3"], CP),
        ]
        in_specs += [vmem, smem] + [vmem] * 9

    out_padded = pl.pallas_call(
        _make_tide_net_kernel(n_block),
        out_shape=jax.ShapeDtypeStruct((V, COP), jnp.float32),
        in_specs=in_specs,
        out_specs=vmem,
        compiler_params=pltpu.CompilerParams(vmem_limit_bytes=96 * 1024 * 1024),
    )(*args)
    return out_padded[:, :C_out]


# --------------------------------------------------------------------------
# Plain-JAX glue
# --------------------------------------------------------------------------
def build_gcn_norm_dense(edge_index, edge_weight, num_nodes):
    """Dense equivalent of torch_geometric gcn_norm (add self loops +
    symmetric D^-1/2 (A+I) D^-1/2).  Edges here contain no self loops."""
    row, col = edge_index[0], edge_index[1]
    a = jnp.zeros((num_nodes, num_nodes), jnp.float32)
    a = a.at[col, row].add(edge_weight)                 # aggregate source j -> target i
    a = a + jnp.eye(num_nodes, dtype=jnp.float32)       # add (remaining) self loops
    deg = a.sum(axis=1)
    dinv = jnp.where(deg > 0, 1.0 / jnp.sqrt(deg), 0.0)
    return dinv[:, None] * a * dinv[None, :]


def init_params(key, C_in, C_width, C_out, n_block):
    def lin_init(k, fan_in, fan_out):
        k1, k2 = jax.random.split(k)
        bound = 1.0 / np.sqrt(fan_in)
        w = jax.random.uniform(k1, (fan_in, fan_out), jnp.float32, -bound, bound)
        b = jax.random.uniform(k2, (fan_out,), jnp.float32, -bound, bound)
        return w, b

    keys = jax.random.split(key, 2 + n_block)
    params = {}
    params["first_w"], params["first_b"] = lin_init(keys[0], C_in, C_width)
    params["last_w"], params["last_b"] = lin_init(keys[1], C_width, C_out)
    blocks = []
    for i in range(n_block):
        bk = jax.random.split(keys[2 + i], 7)
        wg, bg = lin_init(bk[0], C_width, C_width)
        w1, b1 = lin_init(bk[1], 2 * C_width, C_width)   # MiniMLP: [2C, C, C, C]
        w2, b2 = lin_init(bk[2], C_width, C_width)
        w3, b3 = lin_init(bk[3], C_width, C_width)
        blocks.append(dict(
            diffusion_time=jax.random.uniform(bk[4], (C_width,), jnp.float32, 0.0, 0.5),
            alpha=jax.random.uniform(bk[5], (), jnp.float32, -0.1, 0.1),
            betta=jax.random.uniform(bk[6], (), jnp.float32, -0.1, 0.1),
            w_gcn=wg, b_gcn=bg, w1=w1, b1=b1, w2=w2, b2=b2, w3=w3, b3=b3,
        ))
    params["blocks"] = blocks
    return params


def tide_net_reference(params, x_in, evecs, evals, a_norm):
    """Pure-JAX reference mirroring the PyTorch forward (eval mode)."""
    x = x_in @ params["first_w"] + params["first_b"]
    for p in params["blocks"]:
        x_spec = evecs.T @ x
        coefs = jnp.exp(-evals[:, None] * p["diffusion_time"][None, :])
        x_ds = coefs * x_spec - p["alpha"] * x_spec
        x_diffuse = evecs @ x_ds + p["betta"] * x
        h = jnp.maximum(a_norm @ (x_diffuse @ p["w_gcn"]) + p["b_gcn"], 0.0)
        feat = jnp.concatenate([x, h], axis=-1)
        z = jnp.maximum(feat @ p["w1"] + p["b1"], 0.0)
        z = jnp.maximum(z @ p["w2"] + p["b2"], 0.0)
        z = z @ p["w3"] + p["b3"]
        x = z + x
    return x @ params["last_w"] + params["last_b"]


# --------------------------------------------------------------------------
# Main
# --------------------------------------------------------------------------
if __name__ == "__main__":
    V, C_in, C_width, C_out, K, N_block = 16, 4, 32, 4, 8, 2

    key = jax.random.PRNGKey(0)
    k_x, k_e, k_l, k_w, k_p = jax.random.split(key, 5)

    # inputs
    x_in = jax.random.normal(k_x, (V, C_in), jnp.float32)

    # eigen-surrogates: orthonormal evecs [V, K], non-negative evals [K]
    q, _ = jnp.linalg.qr(jax.random.normal(k_e, (V, V), jnp.float32))
    evecs = q[:, :K].astype(jnp.float32)
    evals = jnp.sort(jax.random.uniform(k_l, (K,), jnp.float32, 0.0, 2.0))

    # sparse-L surrogate: ring graph (both directions), positive weights,
    # no self loops (GCN norm adds them).  L._indices() / L._values() analog.
    src = jnp.concatenate([jnp.arange(V), (jnp.arange(V) + 1) % V])
    dst = jnp.concatenate([(jnp.arange(V) + 1) % V, jnp.arange(V)])
    edge_index = jnp.stack([src, dst]).astype(jnp.int32)          # [2, 2V]
    edge_weight = jax.random.uniform(k_w, (2 * V,), jnp.float32, 0.5, 1.5)
    a_norm = build_gcn_norm_dense(edge_index, edge_weight, V)

    mass = jnp.ones((V,), jnp.float32)  # unused in the 'spectral' path (signature fidelity)

    params = init_params(k_p, C_in, C_width, C_out, N_block)

    out = tide_net_forward(params, x_in, evecs, evals, a_norm)
    out = jax.block_until_ready(out)

    ref = jax.block_until_ready(tide_net_reference(params, x_in, evecs, evals, a_norm))
    np.testing.assert_allclose(np.asarray(out), np.asarray(ref), rtol=2e-2, atol=2e-2)

    print("KERNEL_OK")
</pallas_src>

<mosaic_0001>
module attributes {stable_mosaic.version = 11 : i64} {
  func.func @kernel(%arg0: memref<16x4xf32, #tpu.memory_space<vmem>>, %arg1: memref<16x8xf32, #tpu.memory_space<vmem>>, %arg2: memref<16x16xf32, #tpu.memory_space<vmem>>, %arg3: memref<4x128xf32, #tpu.memory_space<vmem>>, %arg4: memref<1x128xf32, #tpu.memory_space<vmem>>, %arg5: memref<128x128xf32, #tpu.memory_space<vmem>>, %arg6: memref<1x128xf32, #tpu.memory_space<vmem>>, %arg7: memref<8x128xf32, #tpu.memory_space<vmem>>, %arg8: memref<1x1xf32, #tpu.memory_space<smem>>, %arg9: memref<128x128xf32, #tpu.memory_space<vmem>>, %arg10: memref<1x128xf32, #tpu.memory_space<vmem>>, %arg11: memref<128x128xf32, #tpu.memory_space<vmem>>, %arg12: memref<128x128xf32, #tpu.memory_space<vmem>>, %arg13: memref<1x128xf32, #tpu.memory_space<vmem>>, %arg14: memref<128x128xf32, #tpu.memory_space<vmem>>, %arg15: memref<1x128xf32, #tpu.memory_space<vmem>>, %arg16: memref<128x128xf32, #tpu.memory_space<vmem>>, %arg17: memref<1x128xf32, #tpu.memory_space<vmem>>, %arg18: memref<8x128xf32, #tpu.memory_space<vmem>>, %arg19: memref<1x1xf32, #tpu.memory_space<smem>>, %arg20: memref<128x128xf32, #tpu.memory_space<vmem>>, %arg21: memref<1x128xf32, #tpu.memory_space<vmem>>, %arg22: memref<128x128xf32, #tpu.memory_space<vmem>>, %arg23: memref<128x128xf32, #tpu.memory_space<vmem>>, %arg24: memref<1x128xf32, #tpu.memory_space<vmem>>, %arg25: memref<128x128xf32, #tpu.memory_space<vmem>>, %arg26: memref<1x128xf32, #tpu.memory_space<vmem>>, %arg27: memref<128x128xf32, #tpu.memory_space<vmem>>, %arg28: memref<1x128xf32, #tpu.memory_space<vmem>>, %arg29: memref<16x128xf32, #tpu.memory_space<vmem>>) attributes {dimension_semantics = [], scalar_prefetch = 0 : i64, scratch_operands = 0 : i64, tpu.core_type = #tpu.core_type<tc>} {
    %c0 = arith.constant 0 : index
    %c0_0 = arith.constant 0 : index
    %0 = vector.load %arg1[%c0, %c0_0] : memref<16x8xf32, #tpu.memory_space<vmem>>, vector<16x8xf32>
    %c0_1 = arith.constant 0 : index
    %c0_2 = arith.constant 0 : index
    %1 = vector.load %arg2[%c0_1, %c0_2] : memref<16x16xf32, #tpu.memory_space<vmem>>, vector<16x16xf32>
    %c0_3 = arith.constant 0 : index
    %c0_4 = arith.constant 0 : index
    %2 = vector.load %arg0[%c0_3, %c0_4] : memref<16x4xf32, #tpu.memory_space<vmem>>, vector<16x4xf32>
    %c0_5 = arith.constant 0 : index
    %c0_6 = arith.constant 0 : index
    %3 = vector.load %arg3[%c0_5, %c0_6] : memref<4x128xf32, #tpu.memory_space<vmem>>, vector<4x128xf32>
    %cst = arith.constant dense<0.000000e+00> : vector<16x128xf32>
    %4 = tpu.matmul %2, %3, %cst {dimension_numbers = #tpu.dot_dimension_numbers<[1], [0], [0], [1], [0, 0, 1, 1], [], []>} : vector<16x4xf32>, vector<4x128xf32>, vector<16x128xf32> -> vector<16x128xf32>
    %c0_7 = arith.constant 0 : index
    %c0_8 = arith.constant 0 : index
    %5 = vector.load %arg4[%c0_7, %c0_8] : memref<1x128xf32, #tpu.memory_space<vmem>>, vector<1x128xf32>
    %6 = vector.broadcast %5 : vector<1x128xf32> to vector<16x128xf32>
    %7 = arith.addf %4, %6 : vector<16x128xf32>
    %cst_9 = arith.constant dense<0.000000e+00> : vector<8x128xf32>
    %8 = tpu.matmul %0, %7, %cst_9 {dimension_numbers = #tpu.dot_dimension_numbers<[0], [0], [1], [1], [0, 1, 1, 1], [], []>} : vector<16x8xf32>, vector<16x128xf32>, vector<8x128xf32> -> vector<8x128xf32>
    %c0_10 = arith.constant 0 : index
    %c0_11 = arith.constant 0 : index
    %9 = vector.load %arg7[%c0_10, %c0_11] : memref<8x128xf32, #tpu.memory_space<vmem>>, vector<8x128xf32>
    %10 = arith.mulf %9, %8 : vector<8x128xf32>
    %cst_12 = arith.constant dense<0.000000e+00> : vector<16x128xf32>
    %11 = tpu.matmul %0, %10, %cst_12 {dimension_numbers = #tpu.dot_dimension_numbers<[1], [0], [0], [1], [0, 0, 1, 1], [], []>} : vector<16x8xf32>, vector<8x128xf32>, vector<16x128xf32> -> vector<16x128xf32>
    %c0_13 = arith.constant 0 : index
    %c0_14 = arith.constant 0 : index
    %12 = memref.load %arg8[%c0_13, %c0_14] : memref<1x1xf32, #tpu.memory_space<smem>>
    %13 = vector.broadcast %12 : f32 to vector<16x128xf32>
    %14 = arith.mulf %13, %7 : vector<16x128xf32>
    %15 = arith.addf %11, %14 : vector<16x128xf32>
    %c0_15 = arith.constant 0 : index
    %c0_16 = arith.constant 0 : index
    %16 = vector.load %arg9[%c0_15, %c0_16] : memref<128x128xf32, #tpu.memory_space<vmem>>, vector<128x128xf32>
    %cst_17 = arith.constant dense<0.000000e+00> : vector<16x128xf32>
    %17 = tpu.matmul %15, %16, %cst_17 {dimension_numbers = #tpu.dot_dimension_numbers<[1], [0], [0], [1], [0, 0, 1, 1], [], []>} : vector<16x128xf32>, vector<128x128xf32>, vector<16x128xf32> -> vector<16x128xf32>
    %cst_18 = arith.constant dense<0.000000e+00> : vector<16x128xf32>
    %18 = tpu.matmul %1, %17, %cst_18 {dimension_numbers = #tpu.dot_dimension_numbers<[1], [0], [0], [1], [0, 0, 1, 1], [], []>} : vector<16x16xf32>, vector<16x128xf32>, vector<16x128xf32> -> vector<16x128xf32>
    %c0_19 = arith.constant 0 : index
    %c0_20 = arith.constant 0 : index
    %19 = vector.load %arg10[%c0_19, %c0_20] : memref<1x128xf32, #tpu.memory_space<vmem>>, vector<1x128xf32>
    %20 = vector.broadcast %19 : vector<1x128xf32> to vector<16x128xf32>
    %21 = arith.addf %18, %20 : vector<16x128xf32>
    %cst_21 = arith.constant 0.000000e+00 : f32
    %22 = vector.broadcast %cst_21 : f32 to vector<16x128xf32>
    %23 = arith.maximumf %21, %22 : vector<16x128xf32>
    %c0_22 = arith.constant 0 : index
    %c0_23 = arith.constant 0 : index
    %24 = vector.load %arg11[%c0_22, %c0_23] : memref<128x128xf32, #tpu.memory_space<vmem>>, vector<128x128xf32>
    %cst_24 = arith.constant dense<0.000000e+00> : vector<16x128xf32>
    %25 = tpu.matmul %7, %24, %cst_24 {dimension_numbers = #tpu.dot_dimension_numbers<[1], [0], [0], [1], [0, 0, 1, 1], [], []>} : vector<16x128xf32>, vector<128x128xf32>, vector<16x128xf32> -> vector<16x128xf32>
    %c0_25 = arith.constant 0 : index
    %c0_26 = arith.constant 0 : index
    %26 = vector.load %arg12[%c0_25, %c0_26] : memref<128x128xf32, #tpu.memory_space<vmem>>, vector<128x128xf32>
    %cst_27 = arith.constant dense<0.000000e+00> : vector<16x128xf32>
    %27 = tpu.matmul %23, %26, %cst_27 {dimension_numbers = #tpu.dot_dimension_numbers<[1], [0], [0], [1], [0, 0, 1, 1], [], []>} : vector<16x128xf32>, vector<128x128xf32>, vector<16x128xf32> -> vector<16x128xf32>
    %28 = arith.addf %25, %27 : vector<16x128xf32>
    %c0_28 = arith.constant 0 : index
    %c0_29 = arith.constant 0 : index
    %29 = vector.load %arg13[%c0_28, %c0_29] : memref<1x128xf32, #tpu.memory_space<vmem>>, vector<1x128xf32>
    %30 = vector.broadcast %29 : vector<1x128xf32> to vector<16x128xf32>
    %31 = arith.addf %28, %30 : vector<16x128xf32>
    %cst_30 = arith.constant 0.000000e+00 : f32
    %32 = vector.broadcast %cst_30 : f32 to vector<16x128xf32>
    %33 = arith.maximumf %31, %32 : vector<16x128xf32>
    %c0_31 = arith.constant 0 : index
    %c0_32 = arith.constant 0 : index
    %34 = vector.load %arg14[%c0_31, %c0_32] : memref<128x128xf32, #tpu.memory_space<vmem>>, vector<128x128xf32>
    %cst_33 = arith.constant dense<0.000000e+00> : vector<16x128xf32>
    %35 = tpu.matmul %33, %34, %cst_33 {dimension_numbers = #tpu.dot_dimension_numbers<[1], [0], [0], [1], [0, 0, 1, 1], [], []>} : vector<16x128xf32>, vector<128x128xf32>, vector<16x128xf32> -> vector<16x128xf32>
    %c0_34 = arith.constant 0 : index
    %c0_35 = arith.constant 0 : index
    %36 = vector.load %arg15[%c0_34, %c0_35] : memref<1x128xf32, #tpu.memory_space<vmem>>, vector<1x128xf32>
    %37 = vector.broadcast %36 : vector<1x128xf32> to vector<16x128xf32>
    %38 = arith.addf %35, %37 : vector<16x128xf32>
    %cst_36 = arith.constant 0.000000e+00 : f32
    %39 = vector.broadcast %cst_36 : f32 to vector<16x128xf32>
    %40 = arith.maximumf %38, %39 : vector<16x128xf32>
    %c0_37 = arith.constant 0 : index
    %c0_38 = arith.constant 0 : index
    %41 = vector.load %arg16[%c0_37, %c0_38] : memref<128x128xf32, #tpu.memory_space<vmem>>, vector<128x128xf32>
    %cst_39 = arith.constant dense<0.000000e+00> : vector<16x128xf32>
    %42 = tpu.matmul %40, %41, %cst_39 {dimension_numbers = #tpu.dot_dimension_numbers<[1], [0], [0], [1], [0, 0, 1, 1], [], []>} : vector<16x128xf32>, vector<128x128xf32>, vector<16x128xf32> -> vector<16x128xf32>
    %c0_40 = arith.constant 0 : index
    %c0_41 = arith.constant 0 : index
    %43 = vector.load %arg17[%c0_40, %c0_41] : memref<1x128xf32, #tpu.memory_space<vmem>>, vector<1x128xf32>
    %44 = vector.broadcast %43 : vector<1x128xf32> to vector<16x128xf32>
    %45 = arith.addf %42, %44 : vector<16x128xf32>
    %46 = arith.addf %45, %7 : vector<16x128xf32>
    %cst_42 = arith.constant dense<0.000000e+00> : vector<8x128xf32>
    %47 = tpu.matmul %0, %46, %cst_42 {dimension_numbers = #tpu.dot_dimension_numbers<[0], [0], [1], [1], [0, 1, 1, 1], [], []>} : vector<16x8xf32>, vector<16x128xf32>, vector<8x128xf32> -> vector<8x128xf32>
    %c0_43 = arith.constant 0 : index
    %c0_44 = arith.constant 0 : index
    %48 = vector.load %arg18[%c0_43, %c0_44] : memref<8x128xf32, #tpu.memory_space<vmem>>, vector<8x128xf32>
    %49 = arith.mulf %48, %47 : vector<8x128xf32>
    %cst_45 = arith.constant dense<0.000000e+00> : vector<16x128xf32>
    %50 = tpu.matmul %0, %49, %cst_45 {dimension_numbers = #tpu.dot_dimension_numbers<[1], [0], [0], [1], [0, 0, 1, 1], [], []>} : vector<16x8xf32>, vector<8x128xf32>, vector<16x128xf32> -> vector<16x128xf32>
    %c0_46 = arith.constant 0 : index
    %c0_47 = arith.constant 0 : index
    %51 = memref.load %arg19[%c0_46, %c0_47] : memref<1x1xf32, #tpu.memory_space<smem>>
    %52 = vector.broadcast %51 : f32 to vector<16x128xf32>
    %53 = arith.mulf %52, %46 : vector<16x128xf32>
    %54 = arith.addf %50, %53 : vector<16x128xf32>
    %c0_48 = arith.constant 0 : index
    %c0_49 = arith.constant 0 : index
    %55 = vector.load %arg20[%c0_48, %c0_49] : memref<128x128xf32, #tpu.memory_space<vmem>>, vector<128x128xf32>
    %cst_50 = arith.constant dense<0.000000e+00> : vector<16x128xf32>
    %56 = tpu.matmul %54, %55, %cst_50 {dimension_numbers = #tpu.dot_dimension_numbers<[1], [0], [0], [1], [0, 0, 1, 1], [], []>} : vector<16x128xf32>, vector<128x128xf32>, vector<16x128xf32> -> vector<16x128xf32>
    %cst_51 = arith.constant dense<0.000000e+00> : vector<16x128xf32>
    %57 = tpu.matmul %1, %56, %cst_51 {dimension_numbers = #tpu.dot_dimension_numbers<[1], [0], [0], [1], [0, 0, 1, 1], [], []>} : vector<16x16xf32>, vector<16x128xf32>, vector<16x128xf32> -> vector<16x128xf32>
    %c0_52 = arith.constant 0 : index
    %c0_53 = arith.constant 0 : index
    %58 = vector.load %arg21[%c0_52, %c0_53] : memref<1x128xf32, #tpu.memory_space<vmem>>, vector<1x128xf32>
    %59 = vector.broadcast %58 : vector<1x128xf32> to vector<16x128xf32>
    %60 = arith.addf %57, %59 : vector<16x128xf32>
    %cst_54 = arith.constant 0.000000e+00 : f32
    %61 = vector.broadcast %cst_54 : f32 to vector<16x128xf32>
    %62 = arith.maximumf %60, %61 : vector<16x128xf32>
    %c0_55 = arith.constant 0 : index
    %c0_56 = arith.constant 0 : index
    %63 = vector.load %arg22[%c0_55, %c0_56] : memref<128x128xf32, #tpu.memory_space<vmem>>, vector<128x128xf32>
    %cst_57 = arith.constant dense<0.000000e+00> : vector<16x128xf32>
    %64 = tpu.matmul %46, %63, %cst_57 {dimension_numbers = #tpu.dot_dimension_numbers<[1], [0], [0], [1], [0, 0, 1, 1], [], []>} : vector<16x128xf32>, vector<128x128xf32>, vector<16x128xf32> -> vector<16x128xf32>
    %c0_58 = arith.constant 0 : index
    %c0_59 = arith.constant 0 : index
    %65 = vector.load %arg23[%c0_58, %c0_59] : memref<128x128xf32, #tpu.memory_space<vmem>>, vector<128x128xf32>
    %cst_60 = arith.constant dense<0.000000e+00> : vector<16x128xf32>
    %66 = tpu.matmul %62, %65, %cst_60 {dimension_numbers = #tpu.dot_dimension_numbers<[1], [0], [0], [1], [0, 0, 1, 1], [], []>} : vector<16x128xf32>, vector<128x128xf32>, vector<16x128xf32> -> vector<16x128xf32>
    %67 = arith.addf %64, %66 : vector<16x128xf32>
    %c0_61 = arith.constant 0 : index
    %c0_62 = arith.constant 0 : index
    %68 = vector.load %arg24[%c0_61, %c0_62] : memref<1x128xf32, #tpu.memory_space<vmem>>, vector<1x128xf32>
    %69 = vector.broadcast %68 : vector<1x128xf32> to vector<16x128xf32>
    %70 = arith.addf %67, %69 : vector<16x128xf32>
    %cst_63 = arith.constant 0.000000e+00 : f32
    %71 = vector.broadcast %cst_63 : f32 to vector<16x128xf32>
    %72 = arith.maximumf %70, %71 : vector<16x128xf32>
    %c0_64 = arith.constant 0 : index
    %c0_65 = arith.constant 0 : index
    %73 = vector.load %arg25[%c0_64, %c0_65] : memref<128x128xf32, #tpu.memory_space<vmem>>, vector<128x128xf32>
    %cst_66 = arith.constant dense<0.000000e+00> : vector<16x128xf32>
    %74 = tpu.matmul %72, %73, %cst_66 {dimension_numbers = #tpu.dot_dimension_numbers<[1], [0], [0], [1], [0, 0, 1, 1], [], []>} : vector<16x128xf32>, vector<128x128xf32>, vector<16x128xf32> -> vector<16x128xf32>
    %c0_67 = arith.constant 0 : index
    %c0_68 = arith.constant 0 : index
    %75 = vector.load %arg26[%c0_67, %c0_68] : memref<1x128xf32, #tpu.memory_space<vmem>>, vector<1x128xf32>
    %76 = vector.broadcast %75 : vector<1x128xf32> to vector<16x128xf32>
    %77 = arith.addf %74, %76 : vector<16x128xf32>
    %cst_69 = arith.constant 0.000000e+00 : f32
    %78 = vector.broadcast %cst_69 : f32 to vector<16x128xf32>
    %79 = arith.maximumf %77, %78 : vector<16x128xf32>
    %c0_70 = arith.constant 0 : index
    %c0_71 = arith.constant 0 : index
    %80 = vector.load %arg27[%c0_70, %c0_71] : memref<128x128xf32, #tpu.memory_space<vmem>>, vector<128x128xf32>
    %cst_72 = arith.constant dense<0.000000e+00> : vector<16x128xf32>
    %81 = tpu.matmul %79, %80, %cst_72 {dimension_numbers = #tpu.dot_dimension_numbers<[1], [0], [0], [1], [0, 0, 1, 1], [], []>} : vector<16x128xf32>, vector<128x128xf32>, vector<16x128xf32> -> vector<16x128xf32>
    %c0_73 = arith.constant 0 : index
    %c0_74 = arith.constant 0 : index
    %82 = vector.load %arg28[%c0_73, %c0_74] : memref<1x128xf32, #tpu.memory_space<vmem>>, vector<1x128xf32>
    %83 = vector.broadcast %82 : vector<1x128xf32> to vector<16x128xf32>
    %84 = arith.addf %81, %83 : vector<16x128xf32>
    %85 = arith.addf %84, %46 : vector<16x128xf32>
    %c0_75 = arith.constant 0 : index
    %c0_76 = arith.constant 0 : index
    %86 = vector.load %arg5[%c0_75, %c0_76] : memref<128x128xf32, #tpu.memory_space<vmem>>, vector<128x128xf32>
    %cst_77 = arith.constant dense<0.000000e+00> : vector<16x128xf32>
    %87 = tpu.matmul %85, %86, %cst_77 {dimension_numbers = #tpu.dot_dimension_numbers<[1], [0], [0], [1], [0, 0, 1, 1], [], []>} : vector<16x128xf32>, vector<128x128xf32>, vector<16x128xf32> -> vector<16x128xf32>
    %c0_78 = arith.constant 0 : index
    %c0_79 = arith.constant 0 : index
    %88 = vector.load %arg6[%c0_78, %c0_79] : memref<1x128xf32, #tpu.memory_space<vmem>>, vector<1x128xf32>
    %89 = vector.broadcast %88 : vector<1x128xf32> to vector<16x128xf32>
    %90 = arith.addf %87, %89 : vector<16x128xf32>
    %c0_80 = arith.constant 0 : index
    %c0_81 = arith.constant 0 : index
    %91 = vector.load %arg29[%c0_80, %c0_81] : memref<16x128xf32, #tpu.memory_space<vmem>>, vector<16x128xf32>
    tpu.vector_store %arg29[%c0_80, %c0_81], %90 {strides = array<i32>} : memref<16x128xf32, #tpu.memory_space<vmem>>, vector<16x128xf32>,
    return
  }
}

</mosaic_0001>

<llo_original>
// kernel: neg.0
$region0: #{neg.0}
  #allocation0 [shape = 's32[1]{0}', space=sflag, size = 0x4, scoped, tag = 'scoped memory for neg.0']
  %s0 = inlined_call_operand.vmem [shape: f32[8], index: 0, kind: input, shape index: {}]
  %s1 = inlined_call_operand.vmem [shape: f32[8], index: 1, kind: output, shape index: {}]
  %v2 = vld [vmem:[%s0] sm:$0x1]
  %3 = xla_tuple %v2
  %4 = xla_tuple %3
  %v5 = vxor.u32 %v2, 2147483648
  %6 = xla_tuple %v5
  %7 = vst [vmem:[%s1] sm:$0x1] %v5

// kernel: tide_net_forward.1
$region0: #{tide_net_forward.1}
  #allocation0 [shape = 'u32[]', space=smem, size = 0x4, offset = 0x4, fixed_abs, tag = 'smem constant byte address 0x4 - core index']
  #allocation1 [shape = 'u32[144,128]{1,0:T(1,128)}', space=vmem, size = 0x12000, scoped, tag = 'internal scratch']
  #allocation2 [shape = 'f32[1,1]{1,0:T(1,128)S(6)}', space=smem, size = 0x200, scoped, tag = 'scoped memory for tide_net_forward.1']
  #allocation3 [shape = 'f32[1,1]{1,0:T(1,128)S(6)}', space=smem, size = 0x200, scoped, tag = 'scoped memory for tide_net_forward.1']
  %s0 = inlined_call_operand.smem [shape: u32[30], index: -1, kind: input, shape index: {}]
  %s1 = sld [smem:[%s0]]
  %s2 = scalar_lea.smem %s0, 1
  %s3 = sld [smem:[%s2]]
  %s4 = scalar_lea.smem %s0, 2
  %s5 = sld [smem:[%s4]]
  %s6 = scalar_lea.smem %s0, 3
  %s7 = sld [smem:[%s6]]
  %s8 = scalar_lea.smem %s0, 4
  %s9 = sld [smem:[%s8]]
  %s10 = scalar_lea.smem %s0, 5
  %s11 = sld [smem:[%s10]]
  %s12 = scalar_lea.smem %s0, 6
  %s13 = sld [smem:[%s12]]
  %s14 = scalar_lea.smem %s0, 7
  %s15 = sld [smem:[%s14]]
  %s16 = scalar_lea.smem %s0, 8
  %s17 = sld [smem:[%s16]]
  %s18 = scalar_lea.smem %s0, 9
  %s19 = sld [smem:[%s18]]
  %s20 = scalar_lea.smem %s0, 10
  %s21 = sld [smem:[%s20]]
  %s22 = scalar_lea.smem %s0, 11
  %s23 = sld [smem:[%s22]]
  %s24 = scalar_lea.smem %s0, 12
  %s25 = sld [smem:[%s24]]
  %s26 = scalar_lea.smem %s0, 13
  %s27 = sld [smem:[%s26]]
  %s28 = scalar_lea.smem %s0, 14
  %s29 = sld [smem:[%s28]]
  %s30 = scalar_lea.smem %s0, 15
  %s31 = sld [smem:[%s30]]
  %s32 = scalar_lea.smem %s0, 16
  %s33 = sld [smem:[%s32]]
  %s34 = scalar_lea.smem %s0, 17
  %s35 = sld [smem:[%s34]]
  %s36 = scalar_lea.smem %s0, 18
  %s37 = sld [smem:[%s36]]
  %s38 = scalar_lea.smem %s0, 19
  %s39 = sld [smem:[%s38]]
  %s40 = scalar_lea.smem %s0, 20
  %s41 = sld [smem:[%s40]]
  %s42 = scalar_lea.smem %s0, 21
  %s43 = sld [smem:[%s42]]
  %s44 = scalar_lea.smem %s0, 22
  %s45 = sld [smem:[%s44]]
  %s46 = scalar_lea.smem %s0, 23
  %s47 = sld [smem:[%s46]]
  %s48 = scalar_lea.smem %s0, 24
  %s49 = sld [smem:[%s48]]
  %s50 = scalar_lea.smem %s0, 25
  %s51 = sld [smem:[%s50]]
  %s52 = scalar_lea.smem %s0, 26
  %s53 = sld [smem:[%s52]]
  %s54 = scalar_lea.smem %s0, 27
  %s55 = sld [smem:[%s54]]
  %s56 = scalar_lea.smem %s0, 28
  %s57 = sld [smem:[%s56]]
  %s58 = scalar_lea.smem %s0, 29
  %s59 = sld [smem:[%s58]]
  %s60 = sld [smem:[#allocation0]]
  $region234: #{tide_net_forward.1} parent=0
    _
  %s62 = ssub.s32 1, %s60
  %s63 = scalar_select 0, %s62, %s60
  %64 = sst [smem:[#allocation2]] %s17
  %65 = sst [smem:[#allocation3]] %s39
  $region1: #{tide_net_forward.1} parent=0
    #allocation4 [shape = 'u8[8192]{0}', space=vmem, size = 0x2000, scoped, tag = 'input window, operand 0, single buffered']
    #allocation5 [shape = 's32[1]{0}', space=sflag, size = 0x4, scoped, tag = 'scoped memory for tide_net_forward.1']
    #allocation6 [shape = 's32[1]{0}', space=sflag, size = 0x4, scoped, tag = 'scoped memory for tide_net_forward.1']
    #allocation7 [shape = 'u8[8192]{0}', space=vmem, size = 0x2000, scoped, tag = 'input window, operand 1, single buffered']
    #allocation8 [shape = 's32[1]{0}', space=sflag, size = 0x4, scoped, tag = 'scoped memory for tide_net_forward.1']
    #allocation9 [shape = 'u8[8192]{0}', space=vmem, size = 0x2000, scoped, tag = 'input window, operand 2, single buffered']
    #allocation10 [shape = 'u8[2048]{0}', space=vmem, size = 0x800, scoped, tag = 'input window, operand 3, single buffered']
    #allocation11 [shape = 's32[1]{0}', space=sflag, size = 0x4, scoped, tag = 'scoped memory for tide_net_forward.1']
    #allocation12 [shape = 'u8[512]{0}', space=vmem, size = 0x400, scoped, tag = 'input window, operand 4, single buffered']
    #allocation13 [shape = 'u8[65536]{0}', space=vmem, size = 0x10000, scoped, tag = 'input window, operand 5, single buffered']
    #allocation14 [shape = 's32[1]{0}', space=sflag, size = 0x4, scoped, tag = 'scoped memory for tide_net_forward.1']
    #allocation15 [shape = 'u8[512]{0}', space=vmem, size = 0x400, scoped, tag = 'input window, operand 6, single buffered']
    #allocation16 [shape = 'u8[4096]{0}', space=vmem, size = 0x1000, scoped, tag = 'input window, operand 7, single buffered']
    #allocation17 [shape = 's32[1]{0}', space=sflag, size = 0x4, scoped, tag = 'scoped memory for tide_net_forward.1']
    #allocation18 [shape = 'u8[65536]{0}', space=vmem, size = 0x10000, scoped, tag = 'input window, operand 9, single buffered']
    #allocation19 [shape = 'u8[512]{0}', space=vmem, size = 0x400, scoped, tag = 'input window, operand 10, single buffered']
    #allocation20 [shape = 's32[1]{0}', space=sflag, size = 0x4, scoped, tag = 'scoped memory for tide_net_forward.1']
    #allocation21 [shape = 'u8[65536]{0}', space=vmem, size = 0x10000, scoped, tag = 'input window, operand 11, single buffered']
    #allocation22 [shape = 'u8[65536]{0}', space=vmem, size = 0x10000, scoped, tag = 'input window, operand 12, single buffered']
    #allocation23 [shape = 's32[1]{0}', space=sflag, size = 0x4, scoped, tag = 'scoped memory for tide_net_forward.1']
    #allocation24 [shape = 'u8[512]{0}', space=vmem, size = 0x400, scoped, tag = 'input window, operand 13, single buffered']
    #allocation25 [shape = 'u8[65536]{0}', space=vmem, size = 0x10000, scoped, tag = 'input window, operand 14, single buffered']
    #allocation26 [shape = 's32[1]{0}', space=sflag, size = 0x4, scoped, tag = 'scoped memory for tide_net_forward.1']
    #allocation27 [shape = 'u8[512]{0}', space=vmem, size = 0x400, scoped, tag = 'input window, operand 15, single buffered']
    #allocation28 [shape = 'u8[65536]{0}', space=vmem, size = 0x10000, scoped, tag = 'input window, operand 16, single buffered']
    #allocation29 [shape = 's32[1]{0}', space=sflag, size = 0x4, scoped, tag = 'scoped memory for tide_net_forward.1']
    #allocation30 [shape = 'u8[512]{0}', space=vmem, size = 0x400, scoped, tag = 'input window, operand 17, single buffered']
    #allocation31 [shape = 'u8[4096]{0}', space=vmem, size = 0x1000, scoped, tag = 'input window, operand 18, single buffered']
    #allocation32 [shape = 's32[1]{0}', space=sflag, size = 0x4, scoped, tag = 'scoped memory for tide_net_forward.1']
    #allocation33 [shape = 'u8[65536]{0}', space=vmem, size = 0x10000, scoped, tag = 'input window, operand 20, single buffered']
    #allocation34 [shape = 'u8[512]{0}', space=vmem, size = 0x400, scoped, tag = 'input window, operand 21, single buffered']
    #allocation35 [shape = 's32[1]{0}', space=sflag, size = 0x4, scoped, tag = 'scoped memory for tide_net_forward.1']
    #allocation36 [shape = 'u8[65536]{0}', space=vmem, size = 0x10000, scoped, tag = 'input window, operand 22, single buffered']
    #allocation37 [shape = 'u8[65536]{0}', space=vmem, size = 0x10000, scoped, tag = 'input window, operand 23, single buffered']
    #allocation38 [shape = 's32[1]{0}', space=sflag, size = 0x4, scoped, tag = 'scoped memory for tide_net_forward.1']
    #allocation39 [shape = 'u8[512]{0}', space=vmem, size = 0x400, scoped, tag = 'input window, operand 24, single buffered']
    #allocation40 [shape = 'u8[65536]{0}', space=vmem, size = 0x10000, scoped, tag = 'input window, operand 25, single buffered']
    #allocation41 [shape = 's32[1]{0}', space=sflag, size = 0x4, scoped, tag = 'scoped memory for tide_net_forward.1']
    #allocation42 [shape = 'u8[512]{0}', space=vmem, size = 0x400, scoped, tag = 'input window, operand 26, single buffered']
    #allocation43 [shape = 'u8[65536]{0}', space=vmem, size = 0x10000, scoped, tag = 'input window, operand 27, single buffered']
    #allocation44 [shape = 's32[1]{0}', space=sflag, size = 0x4, scoped, tag = 'scoped memory for tide_net_forward.1']
    #allocation45 [shape = 'u8[512]{0}', space=vmem, size = 0x400, scoped, tag = 'input window, operand 28, single buffered']
    #allocation46 [shape = 'u8[8192]{0}', space=vmem, size = 0x2000, scoped, tag = 'output window, operand 0, single buffered']
    %66 = vsyncpa [#allocation5], 0
    %67 = vsyncpa [#allocation8], 0
    %68 = vsyncpa [#allocation11], 0
    %69 = vsyncpa [#allocation14], 0
    %70 = vsyncpa [#allocation17], 0
    %71 = vsyncpa [#allocation20], 0
    %72 = vsyncpa [#allocation23], 0
    %73 = vsyncpa [#allocation26], 0
    %74 = vsyncpa [#allocation29], 0
    %75 = vsyncpa [#allocation32], 0
    %76 = vsyncpa [#allocation35], 0
    %77 = vsyncpa [#allocation38], 0
    %78 = vsyncpa [#allocation41], 0
    %79 = vsyncpa [#allocation44], 0
    %80 = vsyncpa [#allocation6], 0
    // Predicated region
    $region2: #{tide_net_forward.1} parent=1 // pred_check
      _
    $region3: #{tide_net_forward.1} parent=1 // pred_check_branch
      %82 = sbr.rel (0) target = $region5
    $region4: #{tide_net_forward.1} parent=1 // pred_region
      %s84 = ssub.s32 256, 256
      %85 = vsyncadd [#allocation5], %s84
      %s86 = sshll.u32 [#allocation4], 4
      %s87 = int_to_ptr.vmem [resolvable:$true] %s86
      %92 = dma.hbm_to_vmem [thread:$0]  %s1, 256, %s87, [#allocation5], 128, 128, 8
    $region5: #{tide_net_forward.1} parent=1 // pred_fallthru
      _
    // Predicated region
    $region6: #{tide_net_forward.1} parent=1 // pred_check
      _
    $region7: #{tide_net_forward.1} parent=1 // pred_check_branch
      %94 = sbr.rel (0) target = $region9
    $region8: #{tide_net_forward.1} parent=1 // pred_region
      %s96 = ssub.s32 256, 256
      %97 = vsyncadd [#allocation8], %s96
      %s98 = sshll.u32 [#allocation7], 4
      %s99 = int_to_ptr.vmem [resolvable:$true] %s98
      %104 = dma.hbm_to_vmem [thread:$0]  %s3, 256, %s99, [#allocation8], 128, 128, 8
    $region9: #{tide_net_forward.1} parent=1 // pred_fallthru
      _
    // Predicated region
    $region10: #{tide_net_forward.1} parent=1 // pred_check
      _
    $region11: #{tide_net_forward.1} parent=1 // pred_check_branch
      %106 = sbr.rel (0) target = $region13
    $region12: #{tide_net_forward.1} parent=1 // pred_region
      %s108 = ssub.s32 256, 256
      %109 = vsyncadd [#allocation8], %s108
      %s110 = sshll.u32 [#allocation9], 4
      %s111 = int_to_ptr.vmem [resolvable:$true] %s110
      %116 = dma.hbm_to_vmem [thread:$0]  %s5, 256, %s111, [#allocation8], 128, 128, 8
    $region13: #{tide_net_forward.1} parent=1 // pred_fallthru
      _
    // Predicated region
    $region14: #{tide_net_forward.1} parent=1 // pred_check
      _
    $region15: #{tide_net_forward.1} parent=1 // pred_check_branch
      %118 = sbr.rel (0) target = $region17
    $region16: #{tide_net_forward.1} parent=1 // pred_region
      %s120 = ssub.s32 64, 64
      %121 = vsyncadd [#allocation11], %s120
      %s123 = sshll.u32 [#allocation10], 4
      %s124 = int_to_ptr.vmem [resolvable:$true] %s123
      %126 = dma.hbm_to_vmem [thread:$0]  %s7, 64, %s124, [#allocation11]
    $region17: #{tide_net_forward.1} parent=1 // pred_fallthru
      _
    // Predicated region
    $region18: #{tide_net_forward.1} parent=1 // pred_check
      _
    $region19: #{tide_net_forward.1} parent=1 // pred_check_branch
      %128 = sbr.rel (0) target = $region21
    $region20: #{tide_net_forward.1} parent=1 // pred_region
      %s130 = ssub.s32 16, 16
      %131 = vsyncadd [#allocation11], %s130
      %s133 = sshll.u32 [#allocation12], 4
      %s134 = int_to_ptr.vmem [resolvable:$true] %s133
      %136 = dma.hbm_to_vmem [thread:$0]  %s9, 16, %s134, [#allocation11]
    $region21: #{tide_net_forward.1} parent=1 // pred_fallthru
      _
    // Predicated region
    $region22: #{tide_net_forward.1} parent=1 // pred_check
      _
    $region23: #{tide_net_forward.1} parent=1 // pred_check_branch
      %138 = sbr.rel (0) target = $region25
    $region24: #{tide_net_forward.1} parent=1 // pred_region
      %s140 = ssub.s32 2048, 2048
      %141 = vsyncadd [#allocation14], %s140
      %s142 = sshll.u32 [#allocation13], 4
      %s143 = int_to_ptr.vmem [resolvable:$true] %s142
      %148 = dma.hbm_to_vmem [thread:$0]  %s11, 2048, %s143, [#allocation14], 128, 128, 8
    $region25: #{tide_net_forward.1} parent=1 // pred_fallthru
      _
    // Predicated region
    $region26: #{tide_net_forward.1} parent=1 // pred_check
      _
    $region27: #{tide_net_forward.1} parent=1 // pred_check_branch
      %150 = sbr.rel (0) target = $region29
    $region28: #{tide_net_forward.1} parent=1 // pred_region
      %s152 = ssub.s32 16, 16
      %153 = vsyncadd [#allocation14], %s152
      %s155 = sshll.u32 [#allocation15], 4
      %s156 = int_to_ptr.vmem [resolvable:$true] %s155
      %158 = dma.hbm_to_vmem [thread:$0]  %s13, 16, %s156, [#allocation14]
    $region29: #{tide_net_forward.1} parent=1 // pred_fallthru
      _
    // Predicated region
    $region30: #{tide_net_forward.1} parent=1 // pred_check
      _
    $region31: #{tide_net_forward.1} parent=1 // pred_check_branch
      %160 = sbr.rel (0) target = $region33
    $region32: #{tide_net_forward.1} parent=1 // pred_region
      %s162 = ssub.s32 128, 128
      %163 = vsyncadd [#allocation17], %s162
      %s165 = sshll.u32 [#allocation16], 4
      %s166 = int_to_ptr.vmem [resolvable:$true] %s165
      %168 = dma.hbm_to_vmem [thread:$0]  %s15, 128, %s166, [#allocation17]
    $region33: #{tide_net_forward.1} parent=1 // pred_fallthru
      _
    // Predicated region
    $region34: #{tide_net_forward.1} parent=1 // pred_check
      _
    $region35: #{tide_net_forward.1} parent=1 // pred_check_branch
      %170 = sbr.rel (0) target = $region37
    $region36: #{tide_net_forward.1} parent=1 // pred_region
      _
    $region37: #{tide_net_forward.1} parent=1 // pred_fallthru
      _
    // Predicated region
    $region38: #{tide_net_forward.1} parent=1 // pred_check
      _
    $region39: #{tide_net_forward.1} parent=1 // pred_check_branch
      %172 = sbr.rel (0) target = $region41
    $region40: #{tide_net_forward.1} parent=1 // pred_region
      %s174 = ssub.s32 2048, 2048
      %175 = vsyncadd [#allocation17], %s174
      %s176 = sshll.u32 [#allocation18], 4
      %s177 = int_to_ptr.vmem [resolvable:$true] %s176
      %182 = dma.hbm_to_vmem [thread:$0]  %s19, 2048, %s177, [#allocation17], 128, 128, 8
    $region41: #{tide_net_forward.1} parent=1 // pred_fallthru
      _
    // Predicated region
    $region42: #{tide_net_forward.1} parent=1 // pred_check
      _
    $region43: #{tide_net_forward.1} parent=1 // pred_check_branch
      %184 = sbr.rel (0) target = $region45
    $region44: #{tide_net_forward.1} parent=1 // pred_region
      %s186 = ssub.s32 16, 16
      %187 = vsyncadd [#allocation20], %s186
      %s189 = sshll.u32 [#allocation19], 4
      %s190 = int_to_ptr.vmem [resolvable:$true] %s189
      %192 = dma.hbm_to_vmem [thread:$0]  %s21, 16, %s190, [#allocation20]
    $region45: #{tide_net_forward.1} parent=1 // pred_fallthru
      _
    // Predicated region
    $region46: #{tide_net_forward.1} parent=1 // pred_check
      _
    $region47: #{tide_net_forward.1} parent=1 // pred_check_branch
      %194 = sbr.rel (0) target = $region49
    $region48: #{tide_net_forward.1} parent=1 // pred_region
      %s196 = ssub.s32 2048, 2048
      %197 = vsyncadd [#allocation20], %s196
      %s198 = sshll.u32 [#allocation21], 4
      %s199 = int_to_ptr.vmem [resolvable:$true] %s198
      %204 = dma.hbm_to_vmem [thread:$0]  %s23, 2048, %s199, [#allocation20], 128, 128, 8
    $region49: #{tide_net_forward.1} parent=1 // pred_fallthru
      _
    // Predicated region
    $region50: #{tide_net_forward.1} parent=1 // pred_check
      _
    $region51: #{tide_net_forward.1} parent=1 // pred_check_branch
      %206 = sbr.rel (0) target = $region53
    $region52: #{tide_net_forward.1} parent=1 // pred_region
      %s208 = ssub.s32 2048, 2048
      %209 = vsyncadd [#allocation23], %s208
      %s210 = sshll.u32 [#allocation22], 4
      %s211 = int_to_ptr.vmem [resolvable:$true] %s210
      %216 = dma.hbm_to_vmem [thread:$0]  %s25, 2048, %s211, [#allocation23], 128, 128, 8
    $region53: #{tide_net_forward.1} parent=1 // pred_fallthru
      _
    // Predicated region
    $region54: #{tide_net_forward.1} parent=1 // pred_check
      _
    $region55: #{tide_net_forward.1} parent=1 // pred_check_branch
      %218 = sbr.rel (0) target = $region57
    $region56: #{tide_net_forward.1} parent=1 // pred_region
      %s220 = ssub.s32 16, 16
      %221 = vsyncadd [#allocation23], %s220
      %s223 = sshll.u32 [#allocation24], 4
      %s224 = int_to_ptr.vmem [resolvable:$true] %s223
      %226 = dma.hbm_to_vmem [thread:$0]  %s27, 16, %s224, [#allocation23]
    $region57: #{tide_net_forward.1} parent=1 // pred_fallthru
      _
    // Predicated region
    $region58: #{tide_net_forward.1} parent=1 // pred_check
      _
    $region59: #{tide_net_forward.1} parent=1 // pred_check_branch
      %228 = sbr.rel (0) target = $region61
    $region60: #{tide_net_forward.1} parent=1 // pred_region
      %s230 = ssub.s32 2048, 2048
      %231 = vsyncadd [#allocation26], %s230
      %s232 = sshll.u32 [#allocation25], 4
      %s233 = int_to_ptr.vmem [resolvable:$true] %s232
      %238 = dma.hbm_to_vmem [thread:$0]  %s29, 2048, %s233, [#allocation26], 128, 128, 8
    $region61: #{tide_net_forward.1} parent=1 // pred_fallthru
      _
    // Predicated region
    $region62: #{tide_net_forward.1} parent=1 // pred_check
      _
    $region63: #{tide_net_forward.1} parent=1 // pred_check_branch
      %240 = sbr.rel (0) target = $region65
    $region64: #{tide_net_forward.1} parent=1 // pred_region
      %s242 = ssub.s32 16, 16
      %243 = vsyncadd [#allocation26], %s242
      %s245 = sshll.u32 [#allocation27], 4
      %s246 = int_to_ptr.vmem [resolvable:$true] %s245
      %248 = dma.hbm_to_vmem [thread:$0]  %s31, 16, %s246, [#allocation26]
    $region65: #{tide_net_forward.1} parent=1 // pred_fallthru
      _
    // Predicated region
    $region66: #{tide_net_forward.1} parent=1 // pred_check
      _
    $region67: #{tide_net_forward.1} parent=1 // pred_check_branch
      %250 = sbr.rel (0) target = $region69
    $region68: #{tide_net_forward.1} parent=1 // pred_region
      %s252 = ssub.s32 2048, 2048
      %253 = vsyncadd [#allocation29], %s252
      %s254 = sshll.u32 [#allocation28], 4
      %s255 = int_to_ptr.vmem [resolvable:$true] %s254
      %260 = dma.hbm_to_vmem [thread:$0]  %s33, 2048, %s255, [#allocation29], 128, 128, 8
    $region69: #{tide_net_forward.1} parent=1 // pred_fallthru
      _
    // Predicated region
    $region70: #{tide_net_forward.1} parent=1 // pred_check
      _
    $region71: #{tide_net_forward.1} parent=1 // pred_check_branch
      %262 = sbr.rel (0) target = $region73
    $region72: #{tide_net_forward.1} parent=1 // pred_region
      %s264 = ssub.s32 16, 16
      %265 = vsyncadd [#allocation29], %s264
      %s267 = sshll.u32 [#allocation30], 4
      %s268 = int_to_ptr.vmem [resolvable:$true] %s267
      %270 = dma.hbm_to_vmem [thread:$0]  %s35, 16, %s268, [#allocation29]
    $region73: #{tide_net_forward.1} parent=1 // pred_fallthru
      _
    // Predicated region
    $region74: #{tide_net_forward.1} parent=1 // pred_check
      _
    $region75: #{tide_net_forward.1} parent=1 // pred_check_branch
      %272 = sbr.rel (0) target = $region77
    $region76: #{tide_net_forward.1} parent=1 // pred_region
      %s274 = ssub.s32 128, 128
      %275 = vsyncadd [#allocation32], %s274
      %s277 = sshll.u32 [#allocation31], 4
      %s278 = int_to_ptr.vmem [resolvable:$true] %s277
      %280 = dma.hbm_to_vmem [thread:$0]  %s37, 128, %s278, [#allocation32]
    $region77: #{tide_net_forward.1} parent=1 // pred_fallthru
      _
    // Predicated region
    $region78: #{tide_net_forward.1} parent=1 // pred_check
      _
    $region79: #{tide_net_forward.1} parent=1 // pred_check_branch
      %282 = sbr.rel (0) target = $region81
    $region80: #{tide_net_forward.1} parent=1 // pred_region
      _
    $region81: #{tide_net_forward.1} parent=1 // pred_fallthru
      _
    // Predicated region
    $region82: #{tide_net_forward.1} parent=1 // pred_check
      _
    $region83: #{tide_net_forward.1} parent=1 // pred_check_branch
      %284 = sbr.rel (0) target = $region85
    $region84: #{tide_net_forward.1} parent=1 // pred_region
      %s286 = ssub.s32 2048, 2048
      %287 = vsyncadd [#allocation32], %s286
      %s288 = sshll.u32 [#allocation33], 4
      %s289 = int_to_ptr.vmem [resolvable:$true] %s288
      %294 = dma.hbm_to_vmem [thread:$0]  %s41, 2048, %s289, [#allocation32], 128, 128, 8
    $region85: #{tide_net_forward.1} parent=1 // pred_fallthru
      _
    // Predicated region
    $region86: #{tide_net_forward.1} parent=1 // pred_check
      _
    $region87: #{tide_net_forward.1} parent=1 // pred_check_branch
      %296 = sbr.rel (0) target = $region89
    $region88: #{tide_net_forward.1} parent=1 // pred_region
      %s298 = ssub.s32 16, 16
      %299 = vsyncadd [#allocation35], %s298
      %s301 = sshll.u32 [#allocation34], 4
      %s302 = int_to_ptr.vmem [resolvable:$true] %s301
      %304 = dma.hbm_to_vmem [thread:$0]  %s43, 16, %s302, [#allocation35]
    $region89: #{tide_net_forward.1} parent=1 // pred_fallthru
      _
    // Predicated region
    $region90: #{tide_net_forward.1} parent=1 // pred_check
      _
    $region91: #{tide_net_forward.1} parent=1 // pred_check_branch
      %306 = sbr.rel (0) target = $region93
    $region92: #{tide_net_forward.1} parent=1 // pred_region
      %s308 = ssub.s32 2048, 2048
      %309 = vsyncadd [#allocation35], %s308
      %s310 = sshll.u32 [#allocation36], 4
      %s311 = int_to_ptr.vmem [resolvable:$true] %s310
      %316 = dma.hbm_to_vmem [thread:$0]  %s45, 2048, %s311, [#allocation35], 128, 128, 8
    $region93: #{tide_net_forward.1} parent=1 // pred_fallthru
      _
    // Predicated region
    $region94: #{tide_net_forward.1} parent=1 // pred_check
      _
    $region95: #{tide_net_forward.1} parent=1 // pred_check_branch
      %318 = sbr.rel (0) target = $region97
    $region96: #{tide_net_forward.1} parent=1 // pred_region
      %s320 = ssub.s32 2048, 2048
      %321 = vsyncadd [#allocation38], %s320
      %s322 = sshll.u32 [#allocation37], 4
      %s323 = int_to_ptr.vmem [resolvable:$true] %s322
      %328 = dma.hbm_to_vmem [thread:$0]  %s47, 2048, %s323, [#allocation38], 128, 128, 8
    $region97: #{tide_net_forward.1} parent=1 // pred_fallthru
      _
    // Predicated region
    $region98: #{tide_net_forward.1} parent=1 // pred_check
      _
    $region99: #{tide_net_forward.1} parent=1 // pred_check_branch
      %330 = sbr.rel (0) target = $region101
    $region100: #{tide_net_forward.1} parent=1 // pred_region
      %s332 = ssub.s32 16, 16
      %333 = vsyncadd [#allocation38], %s332
      %s335 = sshll.u32 [#allocation39], 4
      %s336 = int_to_ptr.vmem [resolvable:$true] %s335
      %338 = dma.hbm_to_vmem [thread:$0]  %s49, 16, %s336, [#allocation38]
    $region101: #{tide_net_forward.1} parent=1 // pred_fallthru
      _
    // Predicated region
    $region102: #{tide_net_forward.1} parent=1 // pred_check
      _
    $region103: #{tide_net_forward.1} parent=1 // pred_check_branch
      %340 = sbr.rel (0) target = $region105
    $region104: #{tide_net_forward.1} parent=1 // pred_region
      %s342 = ssub.s32 2048, 2048
      %343 = vsyncadd [#allocation41], %s342
      %s344 = sshll.u32 [#allocation40], 4
      %s345 = int_to_ptr.vmem [resolvable:$true] %s344
      %350 = dma.hbm_to_vmem [thread:$0]  %s51, 2048, %s345, [#allocation41], 128, 128, 8
    $region105: #{tide_net_forward.1} parent=1 // pred_fallthru
      _
    // Predicated region
    $region106: #{tide_net_forward.1} parent=1 // pred_check
      _
    $region107: #{tide_net_forward.1} parent=1 // pred_check_branch
      %352 = sbr.rel (0) target = $region109
    $region108: #{tide_net_forward.1} parent=1 // pred_region
      %s354 = ssub.s32 16, 16
      %355 = vsyncadd [#allocation41], %s354
      %s357 = sshll.u32 [#allocation42], 4
      %s358 = int_to_ptr.vmem [resolvable:$true] %s357
      %360 = dma.hbm_to_vmem [thread:$0]  %s53, 16, %s358, [#allocation41]
    $region109: #{tide_net_forward.1} parent=1 // pred_fallthru
      _
    // Predicated region
    $region110: #{tide_net_forward.1} parent=1 // pred_check
      _
    $region111: #{tide_net_forward.1} parent=1 // pred_check_branch
      %362 = sbr.rel (0) target = $region113
    $region112: #{tide_net_forward.1} parent=1 // pred_region
      %s364 = ssub.s32 2048, 2048
      %365 = vsyncadd [#allocation44], %s364
      %s366 = sshll.u32 [#allocation43], 4
      %s367 = int_to_ptr.vmem [resolvable:$true] %s366
      %372 = dma.hbm_to_vmem [thread:$0]  %s55, 2048, %s367, [#allocation44], 128, 128, 8
    $region113: #{tide_net_forward.1} parent=1 // pred_fallthru
      _
    // Predicated region
    $region114: #{tide_net_forward.1} parent=1 // pred_check
      _
    $region115: #{tide_net_forward.1} parent=1 // pred_check_branch
      %374 = sbr.rel (0) target = $region117
    $region116: #{tide_net_forward.1} parent=1 // pred_region
      %s376 = ssub.s32 16, 16
      %377 = vsyncadd [#allocation44], %s376
      %s379 = sshll.u32 [#allocation45], 4
      %s380 = int_to_ptr.vmem [resolvable:$true] %s379
      %382 = dma.hbm_to_vmem [thread:$0]  %s57, 16, %s380, [#allocation44]
    $region117: #{tide_net_forward.1} parent=1 // pred_fallthru
      _
    // Predicated region
    $region118: #{tide_net_forward.1} parent=1 // pred_check
      _
    $region119: #{tide_net_forward.1} parent=1 // pred_check_branch
      %384 = sbr.rel (0) target = $region121
    $region120: #{tide_net_forward.1} parent=1 // pred_region
      %385 = dma.done [#allocation5], 256
    $region121: #{tide_net_forward.1} parent=1 // pred_fallthru
      _
    // Predicated region
    $region122: #{tide_net_forward.1} parent=1 // pred_check
      _
    $region123: #{tide_net_forward.1} parent=1 // pred_check_branch
      %387 = sbr.rel (0) target = $region125
    $region124: #{tide_net_forward.1} parent=1 // pred_region
      %388 = dma.done [#allocation8], 256
    $region125: #{tide_net_forward.1} parent=1 // pred_fallthru
      _
    // Predicated region
    $region126: #{tide_net_forward.1} parent=1 // pred_check
      _
    $region127: #{tide_net_forward.1} parent=1 // pred_check_branch
      %390 = sbr.rel (0) target = $region129
    $region128: #{tide_net_forward.1} parent=1 // pred_region
      %391 = dma.done [#allocation8], 256
    $region129: #{tide_net_forward.1} parent=1 // pred_fallthru
      _
    // Predicated region
    $region130: #{tide_net_forward.1} parent=1 // pred_check
      _
    $region131: #{tide_net_forward.1} parent=1 // pred_check_branch
      %393 = sbr.rel (0) target = $region133
    $region132: #{tide_net_forward.1} parent=1 // pred_region
      %394 = dma.done [#allocation11], 64
    $region133: #{tide_net_forward.1} parent=1 // pred_fallthru
      _
    // Predicated region
    $region134: #{tide_net_forward.1} parent=1 // pred_check
      _
    $region135: #{tide_net_forward.1} parent=1 // pred_check_branch
      %396 = sbr.rel (0) target = $region137
    $region136: #{tide_net_forward.1} parent=1 // pred_region
      %397 = dma.done [#allocation11], 16
    $region137: #{tide_net_forward.1} parent=1 // pred_fallthru
      _
    // Predicated region
    $region138: #{tide_net_forward.1} parent=1 // pred_check
      _
    $region139: #{tide_net_forward.1} parent=1 // pred_check_branch
      %399 = sbr.rel (0) target = $region141
    $region140: #{tide_net_forward.1} parent=1 // pred_region
      %400 = dma.done [#allocation14], 2048
    $region141: #{tide_net_forward.1} parent=1 // pred_fallthru
      _
    // Predicated region
    $region142: #{tide_net_forward.1} parent=1 // pred_check
      _
    $region143: #{tide_net_forward.1} parent=1 // pred_check_branch
      %402 = sbr.rel (0) target = $region145
    $region144: #{tide_net_forward.1} parent=1 // pred_region
      %403 = dma.done [#allocation14], 16
    $region145: #{tide_net_forward.1} parent=1 // pred_fallthru
      _
    // Predicated region
    $region146: #{tide_net_forward.1} parent=1 // pred_check
      _
    $region147: #{tide_net_forward.1} parent=1 // pred_check_branch
      %405 = sbr.rel (0) target = $region149
    $region148: #{tide_net_forward.1} parent=1 // pred_region
      %406 = dma.done [#allocation17], 128
    $region149: #{tide_net_forward.1} parent=1 // pred_fallthru
      _
    // Predicated region
    $region150: #{tide_net_forward.1} parent=1 // pred_check
      _
    $region151: #{tide_net_forward.1} parent=1 // pred_check_branch
      %408 = sbr.rel (0) target = $region153
    $region152: #{tide_net_forward.1} parent=1 // pred_region
      %409 = dma.done [#allocation17], 2048
    $region153: #{tide_net_forward.1} parent=1 // pred_fallthru
      _
    // Predicated region
    $region154: #{tide_net_forward.1} parent=1 // pred_check
      _
    $region155: #{tide_net_forward.1} parent=1 // pred_check_branch
      %411 = sbr.rel (0) target = $region157
    $region156: #{tide_net_forward.1} parent=1 // pred_region
      %412 = dma.done [#allocation20], 16
    $region157: #{tide_net_forward.1} parent=1 // pred_fallthru
      _
    // Predicated region
    $region158: #{tide_net_forward.1} parent=1 // pred_check
      _
    $region159: #{tide_net_forward.1} parent=1 // pred_check_branch
      %414 = sbr.rel (0) target = $region161
    $region160: #{tide_net_forward.1} parent=1 // pred_region
      %415 = dma.done [#allocation20], 2048
    $region161: #{tide_net_forward.1} parent=1 // pred_fallthru
      _
    // Predicated region
    $region162: #{tide_net_forward.1} parent=1 // pred_check
      _
    $region163: #{tide_net_forward.1} parent=1 // pred_check_branch
      %417 = sbr.rel (0) target = $region165
    $region164: #{tide_net_forward.1} parent=1 // pred_region
      %418 = dma.done [#allocation23], 2048
    $region165: #{tide_net_forward.1} parent=1 // pred_fallthru
      _
    // Predicated region
    $region166: #{tide_net_forward.1} parent=1 // pred_check
      _
    $region167: #{tide_net_forward.1} parent=1 // pred_check_branch
      %420 = sbr.rel (0) target = $region169
    $region168: #{tide_net_forward.1} parent=1 // pred_region
      %421 = dma.done [#allocation23], 16
    $region169: #{tide_net_forward.1} parent=1 // pred_fallthru
      _
    // Predicated region
    $region170: #{tide_net_forward.1} parent=1 // pred_check
      _
    $region171: #{tide_net_forward.1} parent=1 // pred_check_branch
      %423 = sbr.rel (0) target = $region173
    $region172: #{tide_net_forward.1} parent=1 // pred_region
      %424 = dma.done [#allocation26], 2048
    $region173: #{tide_net_forward.1} parent=1 // pred_fallthru
      _
    // Predicated region
    $region174: #{tide_net_forward.1} parent=1 // pred_check
      _
    $region175: #{tide_net_forward.1} parent=1 // pred_check_branch
      %426 = sbr.rel (0) target = $region177
    $region176: #{tide_net_forward.1} parent=1 // pred_region
      %427 = dma.done [#allocation26], 16
    $region177: #{tide_net_forward.1} parent=1 // pred_fallthru
      _
    // Predicated region
    $region178: #{tide_net_forward.1} parent=1 // pred_check
      _
    $region179: #{tide_net_forward.1} parent=1 // pred_check_branch
      %429 = sbr.rel (0) target = $region181
    $region180: #{tide_net_forward.1} parent=1 // pred_region
      %430 = dma.done [#allocation29], 2048
    $region181: #{tide_net_forward.1} parent=1 // pred_fallthru
      _
    // Predicated region
    $region182: #{tide_net_forward.1} parent=1 // pred_check
      _
    $region183: #{tide_net_forward.1} parent=1 // pred_check_branch
      %432 = sbr.rel (0) target = $region185
    $region184: #{tide_net_forward.1} parent=1 // pred_region
      %433 = dma.done [#allocation29], 16
    $region185: #{tide_net_forward.1} parent=1 // pred_fallthru
      _
    // Predicated region
    $region186: #{tide_net_forward.1} parent=1 // pred_check
      _
    $region187: #{tide_net_forward.1} parent=1 // pred_check_branch
      %435 = sbr.rel (0) target = $region189
    $region188: #{tide_net_forward.1} parent=1 // pred_region
      %436 = dma.done [#allocation32], 128
    $region189: #{tide_net_forward.1} parent=1 // pred_fallthru
      _
    // Predicated region
    $region190: #{tide_net_forward.1} parent=1 // pred_check
      _
    $region191: #{tide_net_forward.1} parent=1 // pred_check_branch
      %438 = sbr.rel (0) target = $region193
    $region192: #{tide_net_forward.1} parent=1 // pred_region
      %439 = dma.done [#allocation32], 2048
    $region193: #{tide_net_forward.1} parent=1 // pred_fallthru
      _
    // Predicated region
    $region194: #{tide_net_forward.1} parent=1 // pred_check
      _
    $region195: #{tide_net_forward.1} parent=1 // pred_check_branch
      %441 = sbr.rel (0) target = $region197
    $region196: #{tide_net_forward.1} parent=1 // pred_region
      %442 = dma.done [#allocation35], 16
    $region197: #{tide_net_forward.1} parent=1 // pred_fallthru
      _
    // Predicated region
    $region198: #{tide_net_forward.1} parent=1 // pred_check
      _
    $region199: #{tide_net_forward.1} parent=1 // pred_check_branch
      %444 = sbr.rel (0) target = $region201
    $region200: #{tide_net_forward.1} parent=1 // pred_region
      %445 = dma.done [#allocation35], 2048
    $region201: #{tide_net_forward.1} parent=1 // pred_fallthru
      _
    // Predicated region
    $region202: #{tide_net_forward.1} parent=1 // pred_check
      _
    $region203: #{tide_net_forward.1} parent=1 // pred_check_branch
      %447 = sbr.rel (0) target = $region205
    $region204: #{tide_net_forward.1} parent=1 // pred_region
      %448 = dma.done [#allocation38], 2048
    $region205: #{tide_net_forward.1} parent=1 // pred_fallthru
      _
    // Predicated region
    $region206: #{tide_net_forward.1} parent=1 // pred_check
      _
    $region207: #{tide_net_forward.1} parent=1 // pred_check_branch
      %450 = sbr.rel (0) target = $region209
    $region208: #{tide_net_forward.1} parent=1 // pred_region
      %451 = dma.done [#allocation38], 16
    $region209: #{tide_net_forward.1} parent=1 // pred_fallthru
      _
    // Predicated region
    $region210: #{tide_net_forward.1} parent=1 // pred_check
      _
    $region211: #{tide_net_forward.1} parent=1 // pred_check_branch
      %453 = sbr.rel (0) target = $region213
    $region212: #{tide_net_forward.1} parent=1 // pred_region
      %454 = dma.done [#allocation41], 2048
    $region213: #{tide_net_forward.1} parent=1 // pred_fallthru
      _
    // Predicated region
    $region214: #{tide_net_forward.1} parent=1 // pred_check
      _
    $region215: #{tide_net_forward.1} parent=1 // pred_check_branch
      %456 = sbr.rel (0) target = $region217
    $region216: #{tide_net_forward.1} parent=1 // pred_region
      %457 = dma.done [#allocation41], 16
    $region217: #{tide_net_forward.1} parent=1 // pred_fallthru
      _
    // Predicated region
    $region218: #{tide_net_forward.1} parent=1 // pred_check
      _
    $region219: #{tide_net_forward.1} parent=1 // pred_check_branch
      %459 = sbr.rel (0) target = $region221
    $region220: #{tide_net_forward.1} parent=1 // pred_region
      %460 = dma.done [#allocation44], 2048
    $region221: #{tide_net_forward.1} parent=1 // pred_fallthru
      _
    // Predicated region
    $region222: #{tide_net_forward.1} parent=1 // pred_check
      _
    $region223: #{tide_net_forward.1} parent=1 // pred_check_branch
      %462 = sbr.rel (0) target = $region225
    $region224: #{tide_net_forward.1} parent=1 // pred_region
      %463 = dma.done [#allocation44], 16
    $region225: #{tide_net_forward.1} parent=1 // pred_fallthru
      _
    %v464 = vld [vmem:[#allocation7] sm:$0xff]
    %v465 = vld [vmem:[#allocation7 + $0x8] sm:$0xff]
    %v466 = vld [vmem:[#allocation9] sm:$0xff]
    %v467 = vld [vmem:[#allocation9 + $0x8] sm:$0xff]
    %v468 = vld [vmem:[#allocation4] sm:$0xff]
    %v469 = vld [vmem:[#allocation4 + $0x8] sm:$0xff]
    %v470 = vld [vmem:[#allocation10] sm:$0xf]
    %v471 = vld [vmem:[#allocation12] sm:$0x1]
    %v473 = vlaneseq
    %v474 = vshrl.u32 %v473, 7
    %v475 = vsub.s32 0, %v474
    %v476 = vrot.slane %v471, %v475
    %vm478 = vcmask 31744
    %v480 = vsel %vm478, %v468, 0
    %v483 = vsel %vm478, %v469, 0
    %vm485 = vcmask 1043456
    %v487 = vsel %vm485, %v470, 0
    %489 = vmatprep.subr.mxu0 0.0
    %490 = vmatpush1.msra.mxu0 %v487
    %491 = vmatprep.subr.mxu0 0.0
    %492 = vmatpush1.msra.mxu0 0.0
    %493 = vmatprep.subr.mxu0 0.0
    %494 = vmatpush1.msra.mxu0 0.0
    %495 = vmatprep.subr.mxu0 0.0
    %496 = vmatpush1.msra.mxu0 0.0
    %497 = vmatprep.subr.mxu0 0.0
    %498 = vmatpush1.msra.mxu0 0.0
    %499 = vmatprep.subr.mxu0 0.0
    %500 = vmatpush1.msra.mxu0 0.0
    %501 = vmatprep.subr.mxu0 0.0
    %502 = vmatpush1.msra.mxu0 0.0
    %503 = vmatprep.subr.mxu0 0.0
    %504 = vmatpush1.msra.mxu0 0.0
    %505 = vmatprep.subr.mxu0 0.0
    %506 = vmatpush1.msra.mxu0 0.0
    %507 = vmatprep.subr.mxu0 0.0
    %508 = vmatpush1.msra.mxu0 0.0
    %509 = vmatprep.subr.mxu0 0.0
    %510 = vmatpush1.msra.mxu0 0.0
    %511 = vmatprep.subr.mxu0 0.0
    %512 = vmatpush1.msra.mxu0 0.0
    %513 = vmatprep.subr.mxu0 0.0
    %514 = vmatpush1.msra.mxu0 0.0
    %515 = vmatprep.subr.mxu0 0.0
    %516 = vmatpush1.msra.mxu0 0.0
    %517 = vmatprep.subr.mxu0 0.0
    %518 = vmatpush1.msra.mxu0 0.0
    %519 = vmatprep.subr.mxu0 0.0
    %520 = vmatpush1.msra.mxu0 0.0
    %521 = vmatprep.subr.mxu0 0.0
    %522 = vmatpush1.msra.mxu0 0.0
    %523 = vmatprep.subr.mxu0 0.0
    %524 = vmatpush1.msra.mxu0 0.0
    %525 = vmatprep.subr.mxu0 0.0
    %526 = vmatpush1.msra.mxu0 0.0
    %527 = vmatprep.subr.mxu0 0.0
    %528 = vmatpush1.msra.mxu0 0.0
    %529 = vmatprep.subr.mxu0 0.0
    %530 = vmatpush1.msra.mxu0 0.0
    %531 = vmatprep.subr.mxu0 0.0
    %532 = vmatpush1.msra.mxu0 0.0
    %533 = vmatprep.subr.mxu0 0.0
    %534 = vmatpush1.msra.mxu0 0.0
    %535 = vmatprep.subr.mxu0 0.0
    %536 = vmatpush1.msra.mxu0 0.0
    %537 = vmatprep.subr.mxu0 0.0
    %538 = vmatpush1.msra.mxu0 0.0
    %539 = vmatprep.subr.mxu0 0.0
    %540 = vmatpush1.msra.mxu0 0.0
    %541 = vmatprep.subr.mxu0 0.0
    %542 = vmatpush1.msra.mxu0 0.0
    %543 = vmatprep.subr.mxu0 0.0
    %544 = vmatpush1.msra.mxu0 0.0
    %545 = vmatprep.subr.mxu0 0.0
    %546 = vmatpush1.msra.mxu0 0.0
    %547 = vmatprep.subr.mxu0 0.0
    %548 = vmatpush1.msra.mxu0 0.0
    %549 = vmatprep.subr.mxu0 0.0
    %550 = vmatpush1.msra.mxu0 0.0
    %551 = vmatprep.subr.mxu0 0.0
    %552 = vmatpush1.msra.mxu0 0.0
    %553 = vmatprep.mubr.f32.mxu0 0.0
    %554 = vmatmul.mubr.f32.gmra.mrb[0].mxu0 %v480
    %v555 = vpop.f32.mrb[0].mxu0
    %v556 = vadd.f32 %v476, %v555
    %v557 = vpop.f32.mrb[0].mxu0
    %558 = vmatprep.mubr.f32.mxu0 0.0
    %559 = vmatmul.mubr.f32.gmra.mrb[0].mxu0 %v483
    %v560 = vpop.f32.mrb[0].mxu0
    %v561 = vadd.f32 %v476, %v560
    %v562 = vpop.f32.mrb[0].mxu0
    %563 = vdwg.mxu0
    %564 = vxpose.xlu0.b32.start [1/16] %v464, 128
    %565 = vxpose.xlu0.b32.cont [2/16] %v465, 128
    %566 = vxpose.xlu0.b32.cont [3/16] 0.0, 128
    %567 = vxpose.xlu0.b32.cont [4/16] 0.0, 128
    %568 = vxpose.xlu0.b32.cont [5/16] 0.0, 128
    %569 = vxpose.xlu0.b32.cont [6/16] 0.0, 128
    %570 = vxpose.xlu0.b32.cont [7/16] 0.0, 128
    %571 = vxpose.xlu0.b32.cont [8/16] 0.0, 128
    %572 = vxpose.xlu0.b32.cont [9/16] 0.0, 128
    %573 = vxpose.xlu0.b32.cont [10/16] 0.0, 128
    %574 = vxpose.xlu0.b32.cont [11/16] 0.0, 128
    %575 = vxpose.xlu0.b32.cont [12/16] 0.0, 128
    %576 = vxpose.xlu0.b32.cont [13/16] 0.0, 128
    %577 = vxpose.xlu0.b32.cont [14/16] 0.0, 128
    %578 = vxpose.xlu0.b32.cont [15/16] 0.0, 128
    %579 = vxpose.xlu0.b32.end [16/16] 0.0, 128
    %v580 = vpop.trf.xlu0
    %v581 = vpop.trf.xlu0
    %v582 = vpop.trf.xlu0
    %v583 = vpop.trf.xlu0
    %v584 = vpop.trf.xlu0
    %v585 = vpop.trf.xlu0
    %v586 = vpop.trf.xlu0
    %v587 = vpop.trf.xlu0
    %v588 = vpop.trf.xlu0
    %v589 = vpop.trf.xlu0
    %v590 = vpop.trf.xlu0
    %v591 = vpop.trf.xlu0
    %v592 = vpop.trf.xlu0
    %v593 = vpop.trf.xlu0
    %v594 = vpop.trf.xlu0
    %v595 = vpop.trf.xlu0
    %vm596 = vcmask 130048
    %v598 = vsel %vm596, %v580, 0
    %600 = vmatprep.subr.mxu0 0.0
    %601 = vmatpush1.msra.mxu0 %v556
    %602 = vmatprep.subr.mxu0 0.0
    %603 = vmatpush1.msra.mxu0 %v561
    %604 = vmatprep.subr.mxu0 0.0
    %605 = vmatpush1.msra.mxu0 0.0
    %606 = vmatprep.subr.mxu0 0.0
    %607 = vmatpush1.msra.mxu0 0.0
    %608 = vmatprep.subr.mxu0 0.0
    %609 = vmatpush1.msra.mxu0 0.0
    %610 = vmatprep.subr.mxu0 0.0
    %611 = vmatpush1.msra.mxu0 0.0
    %612 = vmatprep.subr.mxu0 0.0
    %613 = vmatpush1.msra.mxu0 0.0
    %614 = vmatprep.subr.mxu0 0.0
    %615 = vmatpush1.msra.mxu0 0.0
    %616 = vmatprep.subr.mxu0 0.0
    %617 = vmatpush1.msra.mxu0 0.0
    %618 = vmatprep.subr.mxu0 0.0
    %619 = vmatpush1.msra.mxu0 0.0
    %620 = vmatprep.subr.mxu0 0.0
    %621 = vmatpush1.msra.mxu0 0.0
    %622 = vmatprep.subr.mxu0 0.0
    %623 = vmatpush1.msra.mxu0 0.0
    %624 = vmatprep.subr.mxu0 0.0
    %625 = vmatpush1.msra.mxu0 0.0
    %626 = vmatprep.subr.mxu0 0.0
    %627 = vmatpush1.msra.mxu0 0.0
    %628 = vmatprep.subr.mxu0 0.0
    %629 = vmatpush1.msra.mxu0 0.0
    %630 = vmatprep.subr.mxu0 0.0
    %631 = vmatpush1.msra.mxu0 0.0
    %632 = vmatprep.subr.mxu0 0.0
    %633 = vmatpush1.msra.mxu0 0.0
    %634 = vmatprep.subr.mxu0 0.0
    %635 = vmatpush1.msra.mxu0 0.0
    %636 = vmatprep.subr.mxu0 0.0
    %637 = vmatpush1.msra.mxu0 0.0
    %638 = vmatprep.subr.mxu0 0.0
    %639 = vmatpush1.msra.mxu0 0.0
    %640 = vmatprep.subr.mxu0 0.0
    %641 = vmatpush1.msra.mxu0 0.0
    %642 = vmatprep.subr.mxu0 0.0
    %643 = vmatpush1.msra.mxu0 0.0
    %644 = vmatprep.subr.mxu0 0.0
    %645 = vmatpush1.msra.mxu0 0.0
    %646 = vmatprep.subr.mxu0 0.0
    %647 = vmatpush1.msra.mxu0 0.0
    %648 = vmatprep.subr.mxu0 0.0
    %649 = vmatpush1.msra.mxu0 0.0
    %650 = vmatprep.subr.mxu0 0.0
    %651 = vmatpush1.msra.mxu0 0.0
    %652 = vmatprep.subr.mxu0 0.0
    %653 = vmatpush1.msra.mxu0 0.0
    %654 = vmatprep.subr.mxu0 0.0
    %655 = vmatpush1.msra.mxu0 0.0
    %656 = vmatprep.subr.mxu0 0.0
    %657 = vmatpush1.msra.mxu0 0.0
    %658 = vmatprep.subr.mxu0 0.0
    %659 = vmatpush1.msra.mxu0 0.0
    %660 = vmatprep.subr.mxu0 0.0
    %661 = vmatpush1.msra.mxu0 0.0
    %662 = vmatprep.subr.mxu0 0.0
    %663 = vmatpush1.msra.mxu0 0.0
    %664 = vmatprep.mubr.f32.mxu0 0.0
    %665 = vmatmul.mubr.f32.gmra.mrb[0].mxu0 %v598
    %v666 = vpop.f32.mrb[0].mxu0
    %v667 = vadd.f32 0.0, %v666
    %v668 = vpop.f32.mrb[0].mxu0
    %669 = vdwg.mxu0
    %v670 = vld [vmem:[#allocation16] sm:$0xff]
    %v671 = vmul.f32 %v670, %v667
    %s672 = sld [smem:[#allocation2]]
    %v673 = vstv %s672
    %v674 = vmul.f32 %v673, %v556
    %v675 = vmul.f32 %v673, %v561
    %vm676 = vcmask 64512
    %v678 = vsel %vm676, %v464, 0
    %v681 = vsel %vm676, %v465, 0
    %683 = vmatprep.subr.mxu0 0.0
    %684 = vmatpush1.msra.mxu0 %v671
    %685 = vmatprep.subr.mxu0 0.0
    %686 = vmatpush1.msra.mxu0 0.0
    %687 = vmatprep.subr.mxu0 0.0
    %688 = vmatpush1.msra.mxu0 0.0
    %689 = vmatprep.subr.mxu0 0.0
    %690 = vmatpush1.msra.mxu0 0.0
    %691 = vmatprep.subr.mxu0 0.0
    %692 = vmatpush1.msra.mxu0 0.0
    %693 = vmatprep.subr.mxu0 0.0
    %694 = vmatpush1.msra.mxu0 0.0
    %695 = vmatprep.subr.mxu0 0.0
    %696 = vmatpush1.msra.mxu0 0.0
    %697 = vmatprep.subr.mxu0 0.0
    %698 = vmatpush1.msra.mxu0 0.0
    %699 = vmatprep.subr.mxu0 0.0
    %700 = vmatpush1.msra.mxu0 0.0
    %701 = vmatprep.subr.mxu0 0.0
    %702 = vmatpush1.msra.mxu0 0.0
    %703 = vmatprep.subr.mxu0 0.0
    %704 = vmatpush1.msra.mxu0 0.0
    %705 = vmatprep.subr.mxu0 0.0
    %706 = vmatpush1.msra.mxu0 0.0
    %707 = vmatprep.subr.mxu0 0.0
    %708 = vmatpush1.msra.mxu0 0.0
    %709 = vmatprep.subr.mxu0 0.0
    %710 = vmatpush1.msra.mxu0 0.0
    %711 = vmatprep.subr.mxu0 0.0
    %712 = vmatpush1.msra.mxu0 0.0
    %713 = vmatprep.subr.mxu0 0.0
    %714 = vmatpush1.msra.mxu0 0.0
    %715 = vmatprep.subr.mxu0 0.0
    %716 = vmatpush1.msra.mxu0 0.0
    %717 = vmatprep.subr.mxu0 0.0
    %718 = vmatpush1.msra.mxu0 0.0
    %719 = vmatprep.subr.mxu0 0.0
    %720 = vmatpush1.msra.mxu0 0.0
    %721 = vmatprep.subr.mxu0 0.0
    %722 = vmatpush1.msra.mxu0 0.0
    %723 = vmatprep.subr.mxu0 0.0
    %724 = vmatpush1.msra.mxu0 0.0
    %725 = vmatprep.subr.mxu0 0.0
    %726 = vmatpush1.msra.mxu0 0.0
    %727 = vmatprep.subr.mxu0 0.0
    %728 = vmatpush1.msra.mxu0 0.0
    %729 = vmatprep.subr.mxu0 0.0
    %730 = vmatpush1.msra.mxu0 0.0
    %731 = vmatprep.subr.mxu0 0.0
    %732 = vmatpush1.msra.mxu0 0.0
    %733 = vmatprep.subr.mxu0 0.0
    %734 = vmatpush1.msra.mxu0 0.0
    %735 = vmatprep.subr.mxu0 0.0
    %736 = vmatpush1.msra.mxu0 0.0
    %737 = vmatprep.subr.mxu0 0.0
    %738 = vmatpush1.msra.mxu0 0.0
    %739 = vmatprep.subr.mxu0 0.0
    %740 = vmatpush1.msra.mxu0 0.0
    %741 = vmatprep.subr.mxu0 0.0
    %742 = vmatpush1.msra.mxu0 0.0
    %743 = vmatprep.subr.mxu0 0.0
    %744 = vmatpush1.msra.mxu0 0.0
    %745 = vmatprep.subr.mxu0 0.0
    %746 = vmatpush1.msra.mxu0 0.0
    %747 = vmatprep.mubr.f32.mxu0 0.0
    %748 = vmatmul.mubr.f32.gmra.mrb[0].mxu0 %v678
    %v749 = vpop.f32.mrb[0].mxu0
    %v750 = vadd.f32 %v674, %v749
    %v751 = vpop.f32.mrb[0].mxu0
    %752 = vmatprep.mubr.f32.mxu0 0.0
    %753 = vmatmul.mubr.f32.gmra.mrb[0].mxu0 %v681
    %v754 = vpop.f32.mrb[0].mxu0
    %v755 = vadd.f32 %v675, %v754
    %v756 = vpop.f32.mrb[0].mxu0
    %757 = vdwg.mxu0
    %v758 = vld [vmem:[#allocation18] sm:$0xff]
    %v759 = vld [vmem:[#allocation18 + $0x8] sm:$0xff]
    %v760 = vld [vmem:[#allocation18 + $0x10] sm:$0xff]
    %v761 = vld [vmem:[#allocation18 + $0x18] sm:$0xff]
    %v762 = vld [vmem:[#allocation18 + $0x20] sm:$0xff]
    %v763 = vld [vmem:[#allocation18 + $0x28] sm:$0xff]
    %v764 = vld [vmem:[#allocation18 + $0x30] sm:$0xff]
    %v765 = vld [vmem:[#allocation18 + $0x38] sm:$0xff]
    %v766 = vld [vmem:[#allocation18 + $0x40] sm:$0xff]
    %v767 = vld [vmem:[#allocation18 + $0x48] sm:$0xff]
    %v768 = vld [vmem:[#allocation18 + $0x50] sm:$0xff]
    %v769 = vld [vmem:[#allocation18 + $0x58] sm:$0xff]
    %v770 = vld [vmem:[#allocation18 + $0x60] sm:$0xff]
    %v771 = vld [vmem:[#allocation18 + $0x68] sm:$0xff]
    %v772 = vld [vmem:[#allocation18 + $0x70] sm:$0xff]
    %v773 = vld [vmem:[#allocation18 + $0x78] sm:$0xff]
    %774 = vmatprep.subr.mxu0 0.0
    %775 = vmatpush1.msra.mxu0 %v758
    %776 = vmatprep.subr.mxu0 0.0
    %777 = vmatpush1.msra.mxu0 %v759
    %778 = vmatprep.subr.mxu0 0.0
    %779 = vmatpush1.msra.mxu0 %v760
    %780 = vmatprep.subr.mxu0 0.0
    %781 = vmatpush1.msra.mxu0 %v761
    %782 = vmatprep.subr.mxu0 0.0
    %783 = vmatpush1.msra.mxu0 %v762
    %784 = vmatprep.subr.mxu0 0.0
    %785 = vmatpush1.msra.mxu0 %v763
    %786 = vmatprep.subr.mxu0 0.0
    %787 = vmatpush1.msra.mxu0 %v764
    %788 = vmatprep.subr.mxu0 0.0
    %789 = vmatpush1.msra.mxu0 %v765
    %790 = vmatprep.subr.mxu0 0.0
    %791 = vmatpush1.msra.mxu0 %v766
    %792 = vmatprep.subr.mxu0 0.0
    %793 = vmatpush1.msra.mxu0 %v767
    %794 = vmatprep.subr.mxu0 0.0
    %795 = vmatpush1.msra.mxu0 %v768
    %796 = vmatprep.subr.mxu0 0.0
    %797 = vmatpush1.msra.mxu0 %v769
    %798 = vmatprep.subr.mxu0 0.0
    %799 = vmatpush1.msra.mxu0 %v770
    %800 = vmatprep.subr.mxu0 0.0
    %801 = vmatpush1.msra.mxu0 %v771
    %802 = vmatprep.subr.mxu0 0.0
    %803 = vmatpush1.msra.mxu0 %v772
    %804 = vmatprep.subr.mxu0 0.0
    %805 = vmatpush1.msra.mxu0 %v773
    %806 = vmatprep.subr.mxu0 0.0
    %807 = vmatpush1.msra.mxu0 0.0
    %808 = vmatprep.subr.mxu0 0.0
    %809 = vmatpush1.msra.mxu0 0.0
    %810 = vmatprep.subr.mxu0 0.0
    %811 = vmatpush1.msra.mxu0 0.0
    %812 = vmatprep.subr.mxu0 0.0
    %813 = vmatpush1.msra.mxu0 0.0
    %814 = vmatprep.subr.mxu0 0.0
    %815 = vmatpush1.msra.mxu0 0.0
    %816 = vmatprep.subr.mxu0 0.0
    %817 = vmatpush1.msra.mxu0 0.0
    %818 = vmatprep.subr.mxu0 0.0
    %819 = vmatpush1.msra.mxu0 0.0
    %820 = vmatprep.subr.mxu0 0.0
    %821 = vmatpush1.msra.mxu0 0.0
    %822 = vmatprep.subr.mxu0 0.0
    %823 = vmatpush1.msra.mxu0 0.0
    %824 = vmatprep.subr.mxu0 0.0
    %825 = vmatpush1.msra.mxu0 0.0
    %826 = vmatprep.subr.mxu0 0.0
    %827 = vmatpush1.msra.mxu0 0.0
    %828 = vmatprep.subr.mxu0 0.0
    %829 = vmatpush1.msra.mxu0 0.0
    %830 = vmatprep.subr.mxu0 0.0
    %831 = vmatpush1.msra.mxu0 0.0
    %832 = vmatprep.subr.mxu0 0.0
    %833 = vmatpush1.msra.mxu0 0.0
    %834 = vmatprep.subr.mxu0 0.0
    %835 = vmatpush1.msra.mxu0 0.0
    %836 = vmatprep.subr.mxu0 0.0
    %837 = vmatpush1.msra.mxu0 0.0
    %838 = vmatprep.mubr.f32.mxu0 0.0
    %839 = vmatmul.mubr.f32.gmra.mrb[0].mxu0 %v750
    %v840 = vpop.f32.mrb[0].mxu0
    %v841 = vadd.f32 0.0, %v840
    %v842 = vpop.f32.mrb[0].mxu0
    %843 = vmatprep.mubr.f32.mxu0 0.0
    %844 = vmatmul.mubr.f32.gmra.mrb[0].mxu0 %v755
    %v845 = vpop.f32.mrb[0].mxu0
    %v846 = vadd.f32 0.0, %v845
    %v847 = vpop.f32.mrb[0].mxu0
    %848 = vdwg.mxu0
    %v849 = vld [vmem:[#allocation19] sm:$0x1]
    %v851 = vlaneseq
    %v852 = vshrl.u32 %v851, 7
    %v853 = vsub.s32 0, %v852
    %v854 = vrot.slane %v849, %v853
    %v857 = vsel %vm596, %v466, 0
    %v860 = vsel %vm596, %v467, 0
    %862 = vmatprep.subr.mxu0 0.0
    %863 = vmatpush1.msra.mxu0 %v841
    %864 = vmatprep.subr.mxu0 0.0
    %865 = vmatpush1.msra.mxu0 %v846
    %866 = vmatprep.subr.mxu0 0.0
    %867 = vmatpush1.msra.mxu0 0.0
    %868 = vmatprep.subr.mxu0 0.0
    %869 = vmatpush1.msra.mxu0 0.0
    %870 = vmatprep.subr.mxu0 0.0
    %871 = vmatpush1.msra.mxu0 0.0
    %872 = vmatprep.subr.mxu0 0.0
    %873 = vmatpush1.msra.mxu0 0.0
    %874 = vmatprep.subr.mxu0 0.0
    %875 = vmatpush1.msra.mxu0 0.0
    %876 = vmatprep.subr.mxu0 0.0
    %877 = vmatpush1.msra.mxu0 0.0
    %878 = vmatprep.subr.mxu0 0.0
    %879 = vmatpush1.msra.mxu0 0.0
    %880 = vmatprep.subr.mxu0 0.0
    %881 = vmatpush1.msra.mxu0 0.0
    %882 = vmatprep.subr.mxu0 0.0
    %883 = vmatpush1.msra.mxu0 0.0
    %884 = vmatprep.subr.mxu0 0.0
    %885 = vmatpush1.msra.mxu0 0.0
    %886 = vmatprep.subr.mxu0 0.0
    %887 = vmatpush1.msra.mxu0 0.0
    %888 = vmatprep.subr.mxu0 0.0
    %889 = vmatpush1.msra.mxu0 0.0
    %890 = vmatprep.subr.mxu0 0.0
    %891 = vmatpush1.msra.mxu0 0.0
    %892 = vmatprep.subr.mxu0 0.0
    %893 = vmatpush1.msra.mxu0 0.0
    %894 = vmatprep.subr.mxu0 0.0
    %895 = vmatpush1.msra.mxu0 0.0
    %896 = vmatprep.subr.mxu0 0.0
    %897 = vmatpush1.msra.mxu0 0.0
    %898 = vmatprep.subr.mxu0 0.0
    %899 = vmatpush1.msra.mxu0 0.0
    %900 = vmatprep.subr.mxu0 0.0
    %901 = vmatpush1.msra.mxu0 0.0
    %902 = vmatprep.subr.mxu0 0.0
    %903 = vmatpush1.msra.mxu0 0.0
    %904 = vmatprep.subr.mxu0 0.0
    %905 = vmatpush1.msra.mxu0 0.0
    %906 = vmatprep.subr.mxu0 0.0
    %907 = vmatpush1.msra.mxu0 0.0
    %908 = vmatprep.subr.mxu0 0.0
    %909 = vmatpush1.msra.mxu0 0.0
    %910 = vmatprep.subr.mxu0 0.0
    %911 = vmatpush1.msra.mxu0 0.0
    %912 = vmatprep.subr.mxu0 0.0
    %913 = vmatpush1.msra.mxu0 0.0
    %914 = vmatprep.subr.mxu0 0.0
    %915 = vmatpush1.msra.mxu0 0.0
    %916 = vmatprep.subr.mxu0 0.0
    %917 = vmatpush1.msra.mxu0 0.0
    %918 = vmatprep.subr.mxu0 0.0
    %919 = vmatpush1.msra.mxu0 0.0
    %920 = vmatprep.subr.mxu0 0.0
    %921 = vmatpush1.msra.mxu0 0.0
    %922 = vmatprep.subr.mxu0 0.0
    %923 = vmatpush1.msra.mxu0 0.0
    %924 = vmatprep.subr.mxu0 0.0
    %925 = vmatpush1.msra.mxu0 0.0
    %926 = vmatprep.mubr.f32.mxu0 0.0
    %927 = vmatmul.mubr.f32.gmra.mrb[0].mxu0 %v857
    %v928 = vpop.f32.mrb[0].mxu0
    %v929 = vadd.f32 %v854, %v928
    %v930 = vpop.f32.mrb[0].mxu0
    %931 = vmatprep.mubr.f32.mxu0 0.0
    %932 = vmatmul.mubr.f32.gmra.mrb[0].mxu0 %v860
    %v933 = vpop.f32.mrb[0].mxu0
    %v934 = vadd.f32 %v854, %v933
    %v935 = vpop.f32.mrb[0].mxu0
    %936 = vdwg.mxu0
    %v937 = vmax.f32 %v929, 0.0
    %v938 = vmax.f32 %v934, 0.0
    %v939 = vld [vmem:[#allocation21] sm:$0xff]
    %v940 = vld [vmem:[#allocation21 + $0x8] sm:$0xff]
    %v941 = vld [vmem:[#allocation21 + $0x10] sm:$0xff]
    %v942 = vld [vmem:[#allocation21 + $0x18] sm:$0xff]
    %v943 = vld [vmem:[#allocation21 + $0x20] sm:$0xff]
    %v944 = vld [vmem:[#allocation21 + $0x28] sm:$0xff]
    %v945 = vld [vmem:[#allocation21 + $0x30] sm:$0xff]
    %v946 = vld [vmem:[#allocation21 + $0x38] sm:$0xff]
    %v947 = vld [vmem:[#allocation21 + $0x40] sm:$0xff]
    %v948 = vld [vmem:[#allocation21 + $0x48] sm:$0xff]
    %v949 = vld [vmem:[#allocation21 + $0x50] sm:$0xff]
    %v950 = vld [vmem:[#allocation21 + $0x58] sm:$0xff]
    %v951 = vld [vmem:[#allocation21 + $0x60] sm:$0xff]
    %v952 = vld [vmem:[#allocation21 + $0x68] sm:$0xff]
    %v953 = vld [vmem:[#allocation21 + $0x70] sm:$0xff]
    %v954 = vld [vmem:[#allocation21 + $0x78] sm:$0xff]
    %v955 = vld [vmem:[#allocation22] sm:$0xff]
    %v956 = vld [vmem:[#allocation22 + $0x8] sm:$0xff]
    %v957 = vld [vmem:[#allocation22 + $0x10] sm:$0xff]
    %v958 = vld [vmem:[#allocation22 + $0x18] sm:$0xff]
    %v959 = vld [vmem:[#allocation22 + $0x20] sm:$0xff]
    %v960 = vld [vmem:[#allocation22 + $0x28] sm:$0xff]
    %v961 = vld [vmem:[#allocation22 + $0x30] sm:$0xff]
    %v962 = vld [vmem:[#allocation22 + $0x38] sm:$0xff]
    %v963 = vld [vmem:[#allocation22 + $0x40] sm:$0xff]
    %v964 = vld [vmem:[#allocation22 + $0x48] sm:$0xff]
    %v965 = vld [vmem:[#allocation22 + $0x50] sm:$0xff]
    %v966 = vld [vmem:[#allocation22 + $0x58] sm:$0xff]
    %v967 = vld [vmem:[#allocation22 + $0x60] sm:$0xff]
    %v968 = vld [vmem:[#allocation22 + $0x68] sm:$0xff]
    %v969 = vld [vmem:[#allocation22 + $0x70] sm:$0xff]
    %v970 = vld [vmem:[#allocation22 + $0x78] sm:$0xff]
    %971 = vmatprep.subr.mxu0 0.0
    %972 = vmatpush1.msra.mxu0 %v955
    %973 = vmatprep.subr.mxu0 0.0
    %974 = vmatpush1.msra.mxu0 %v956
    %975 = vmatprep.subr.mxu0 0.0
    %976 = vmatpush1.msra.mxu0 %v957
    %977 = vmatprep.subr.mxu0 0.0
    %978 = vmatpush1.msra.mxu0 %v958
    %979 = vmatprep.subr.mxu0 0.0
    %980 = vmatpush1.msra.mxu0 %v959
    %981 = vmatprep.subr.mxu0 0.0
    %982 = vmatpush1.msra.mxu0 %v960
    %983 = vmatprep.subr.mxu0 0.0
    %984 = vmatpush1.msra.mxu0 %v961
    %985 = vmatprep.subr.mxu0 0.0
    %986 = vmatpush1.msra.mxu0 %v962
    %987 = vmatprep.subr.mxu0 0.0
    %988 = vmatpush1.msra.mxu0 %v963
    %989 = vmatprep.subr.mxu0 0.0
    %990 = vmatpush1.msra.mxu0 %v964
    %991 = vmatprep.subr.mxu0 0.0
    %992 = vmatpush1.msra.mxu0 %v965
    %993 = vmatprep.subr.mxu0 0.0
    %994 = vmatpush1.msra.mxu0 %v966
    %995 = vmatprep.subr.mxu0 0.0
    %996 = vmatpush1.msra.mxu0 %v967
    %997 = vmatprep.subr.mxu0 0.0
    %998 = vmatpush1.msra.mxu0 %v968
    %999 = vmatprep.subr.mxu0 0.0
    %1000 = vmatpush1.msra.mxu0 %v969
    %1001 = vmatprep.subr.mxu0 0.0
    %1002 = vmatpush1.msra.mxu0 %v970
    %1003 = vmatprep.subr.mxu0 0.0
    %1004 = vmatpush1.msra.mxu0 0.0
    %1005 = vmatprep.subr.mxu0 0.0
    %1006 = vmatpush1.msra.mxu0 0.0
    %1007 = vmatprep.subr.mxu0 0.0
    %1008 = vmatpush1.msra.mxu0 0.0
    %1009 = vmatprep.subr.mxu0 0.0
    %1010 = vmatpush1.msra.mxu0 0.0
    %1011 = vmatprep.subr.mxu0 0.0
    %1012 = vmatpush1.msra.mxu0 0.0
    %1013 = vmatprep.subr.mxu0 0.0
    %1014 = vmatpush1.msra.mxu0 0.0
    %1015 = vmatprep.subr.mxu0 0.0
    %1016 = vmatpush1.msra.mxu0 0.0
    %1017 = vmatprep.subr.mxu0 0.0
    %1018 = vmatpush1.msra.mxu0 0.0
    %1019 = vmatprep.subr.mxu0 0.0
    %1020 = vmatpush1.msra.mxu0 0.0
    %1021 = vmatprep.subr.mxu0 0.0
    %1022 = vmatpush1.msra.mxu0 0.0
    %1023 = vmatprep.subr.mxu0 0.0
    %1024 = vmatpush1.msra.mxu0 0.0
    %1025 = vmatprep.subr.mxu0 0.0
    %1026 = vmatpush1.msra.mxu0 0.0
    %1027 = vmatprep.subr.mxu0 0.0
    %1028 = vmatpush1.msra.mxu0 0.0
    %1029 = vmatprep.subr.mxu0 0.0
    %1030 = vmatpush1.msra.mxu0 0.0
    %1031 = vmatprep.subr.mxu0 0.0
    %1032 = vmatpush1.msra.mxu0 0.0
    %1033 = vmatprep.subr.mxu0 0.0
    %1034 = vmatpush1.msra.mxu0 0.0
    %1035 = vmatprep.mubr.f32.mxu0 0.0
    %1036 = vmatmul.mubr.f32.gmra.mrb[0].mxu0 %v937
    %v1037 = vpop.f32.mrb[0].mxu0
    %v1038 = vadd.f32 0.0, %v1037
    %v1039 = vpop.f32.mrb[0].mxu0
    %1040 = vmatprep.mubr.f32.mxu0 0.0
    %1041 = vmatmul.mubr.f32.gmra.mrb[0].mxu0 %v938
    %v1042 = vpop.f32.mrb[0].mxu0
    %v1043 = vadd.f32 0.0, %v1042
    %v1044 = vpop.f32.mrb[0].mxu0
    %1045 = vdwg.mxu0
    %1046 = vmatprep.subr.mxu0 0.0
    %1047 = vmatpush1.msra.mxu0 %v939
    %1048 = vmatprep.subr.mxu0 0.0
    %1049 = vmatpush1.msra.mxu0 %v940
    %1050 = vmatprep.subr.mxu0 0.0
    %1051 = vmatpush1.msra.mxu0 %v941
    %1052 = vmatprep.subr.mxu0 0.0
    %1053 = vmatpush1.msra.mxu0 %v942
    %1054 = vmatprep.subr.mxu0 0.0
    %1055 = vmatpush1.msra.mxu0 %v943
    %1056 = vmatprep.subr.mxu0 0.0
    %1057 = vmatpush1.msra.mxu0 %v944
    %1058 = vmatprep.subr.mxu0 0.0
    %1059 = vmatpush1.msra.mxu0 %v945
    %1060 = vmatprep.subr.mxu0 0.0
    %1061 = vmatpush1.msra.mxu0 %v946
    %1062 = vmatprep.subr.mxu0 0.0
    %1063 = vmatpush1.msra.mxu0 %v947
    %1064 = vmatprep.subr.mxu0 0.0
    %1065 = vmatpush1.msra.mxu0 %v948
    %1066 = vmatprep.subr.mxu0 0.0
    %1067 = vmatpush1.msra.mxu0 %v949
    %1068 = vmatprep.subr.mxu0 0.0
    %1069 = vmatpush1.msra.mxu0 %v950
    %1070 = vmatprep.subr.mxu0 0.0
    %1071 = vmatpush1.msra.mxu0 %v951
    %1072 = vmatprep.subr.mxu0 0.0
    %1073 = vmatpush1.msra.mxu0 %v952
    %1074 = vmatprep.subr.mxu0 0.0
    %1075 = vmatpush1.msra.mxu0 %v953
    %1076 = vmatprep.subr.mxu0 0.0
    %1077 = vmatpush1.msra.mxu0 %v954
    %1078 = vmatprep.subr.mxu0 0.0
    %1079 = vmatpush1.msra.mxu0 0.0
    %1080 = vmatprep.subr.mxu0 0.0
    %1081 = vmatpush1.msra.mxu0 0.0
    %1082 = vmatprep.subr.mxu0 0.0
    %1083 = vmatpush1.msra.mxu0 0.0
    %1084 = vmatprep.subr.mxu0 0.0
    %1085 = vmatpush1.msra.mxu0 0.0
    %1086 = vmatprep.subr.mxu0 0.0
    %1087 = vmatpush1.msra.mxu0 0.0
    %1088 = vmatprep.subr.mxu0 0.0
    %1089 = vmatpush1.msra.mxu0 0.0
    %1090 = vmatprep.subr.mxu0 0.0
    %1091 = vmatpush1.msra.mxu0 0.0
    %1092 = vmatprep.subr.mxu0 0.0
    %1093 = vmatpush1.msra.mxu0 0.0
    %1094 = vmatprep.subr.mxu0 0.0
    %1095 = vmatpush1.msra.mxu0 0.0
    %1096 = vmatprep.subr.mxu0 0.0
    %1097 = vmatpush1.msra.mxu0 0.0
    %1098 = vmatprep.subr.mxu0 0.0
    %1099 = vmatpush1.msra.mxu0 0.0
    %1100 = vmatprep.subr.mxu0 0.0
    %1101 = vmatpush1.msra.mxu0 0.0
    %1102 = vmatprep.subr.mxu0 0.0
    %1103 = vmatpush1.msra.mxu0 0.0
    %1104 = vmatprep.subr.mxu0 0.0
    %1105 = vmatpush1.msra.mxu0 0.0
    %1106 = vmatprep.subr.mxu0 0.0
    %1107 = vmatpush1.msra.mxu0 0.0
    %1108 = vmatprep.subr.mxu0 0.0
    %1109 = vmatpush1.msra.mxu0 0.0
    %1110 = vmatprep.mubr.f32.mxu0 0.0
    %1111 = vmatmul.mubr.f32.gmra.mrb[0].mxu0 %v556
    %v1112 = vpop.f32.mrb[0].mxu0
    %v1113 = vadd.f32 %v1038, %v1112
    %v1114 = vpop.f32.mrb[0].mxu0
    %1115 = vmatprep.mubr.f32.mxu0 0.0
    %1116 = vmatmul.mubr.f32.gmra.mrb[0].mxu0 %v561
    %v1117 = vpop.f32.mrb[0].mxu0
    %v1118 = vadd.f32 %v1043, %v1117
    %v1119 = vpop.f32.mrb[0].mxu0
    %1120 = vdwg.mxu0
    %v1121 = vld [vmem:[#allocation24] sm:$0x1]
    %v1123 = vlaneseq
    %v1124 = vshrl.u32 %v1123, 7
    %v1125 = vsub.s32 0, %v1124
    %v1126 = vrot.slane %v1121, %v1125
    %v1128 = vadd.f32 %v1113, %v1126
    %v1129 = vadd.f32 %v1118, %v1126
    %v1130 = vmax.f32 %v1128, 0.0
    %v1131 = vmax.f32 %v1129, 0.0
    %v1132 = vld [vmem:[#allocation25] sm:$0xff]
    %v1133 = vld [vmem:[#allocation25 + $0x8] sm:$0xff]
    %v1134 = vld [vmem:[#allocation25 + $0x10] sm:$0xff]
    %v1135 = vld [vmem:[#allocation25 + $0x18] sm:$0xff]
    %v1136 = vld [vmem:[#allocation25 + $0x20] sm:$0xff]
    %v1137 = vld [vmem:[#allocation25 + $0x28] sm:$0xff]
    %v1138 = vld [vmem:[#allocation25 + $0x30] sm:$0xff]
    %v1139 = vld [vmem:[#allocation25 + $0x38] sm:$0xff]
    %v1140 = vld [vmem:[#allocation25 + $0x40] sm:$0xff]
    %v1141 = vld [vmem:[#allocation25 + $0x48] sm:$0xff]
    %v1142 = vld [vmem:[#allocation25 + $0x50] sm:$0xff]
    %v1143 = vld [vmem:[#allocation25 + $0x58] sm:$0xff]
    %v1144 = vld [vmem:[#allocation25 + $0x60] sm:$0xff]
    %v1145 = vld [vmem:[#allocation25 + $0x68] sm:$0xff]
    %v1146 = vld [vmem:[#allocation25 + $0x70] sm:$0xff]
    %v1147 = vld [vmem:[#allocation25 + $0x78] sm:$0xff]
    %v1148 = vld [vmem:[#allocation27] sm:$0x1]
    %v1150 = vlaneseq
    %v1151 = vshrl.u32 %v1150, 7
    %v1152 = vsub.s32 0, %v1151
    %v1153 = vrot.slane %v1148, %v1152
    %1155 = vmatprep.subr.mxu0 0.0
    %1156 = vmatpush1.msra.mxu0 %v1132
    %1157 = vmatprep.subr.mxu0 0.0
    %1158 = vmatpush1.msra.mxu0 %v1133
    %1159 = vmatprep.subr.mxu0 0.0
    %1160 = vmatpush1.msra.mxu0 %v1134
    %1161 = vmatprep.subr.mxu0 0.0
    %1162 = vmatpush1.msra.mxu0 %v1135
    %1163 = vmatprep.subr.mxu0 0.0
    %1164 = vmatpush1.msra.mxu0 %v1136
    %1165 = vmatprep.subr.mxu0 0.0
    %1166 = vmatpush1.msra.mxu0 %v1137
    %1167 = vmatprep.subr.mxu0 0.0
    %1168 = vmatpush1.msra.mxu0 %v1138
    %1169 = vmatprep.subr.mxu0 0.0
    %1170 = vmatpush1.msra.mxu0 %v1139
    %1171 = vmatprep.subr.mxu0 0.0
    %1172 = vmatpush1.msra.mxu0 %v1140
    %1173 = vmatprep.subr.mxu0 0.0
    %1174 = vmatpush1.msra.mxu0 %v1141
    %1175 = vmatprep.subr.mxu0 0.0
    %1176 = vmatpush1.msra.mxu0 %v1142
    %1177 = vmatprep.subr.mxu0 0.0
    %1178 = vmatpush1.msra.mxu0 %v1143
    %1179 = vmatprep.subr.mxu0 0.0
    %1180 = vmatpush1.msra.mxu0 %v1144
    %1181 = vmatprep.subr.mxu0 0.0
    %1182 = vmatpush1.msra.mxu0 %v1145
    %1183 = vmatprep.subr.mxu0 0.0
    %1184 = vmatpush1.msra.mxu0 %v1146
    %1185 = vmatprep.subr.mxu0 0.0
    %1186 = vmatpush1.msra.mxu0 %v1147
    %1187 = vmatprep.subr.mxu0 0.0
    %1188 = vmatpush1.msra.mxu0 0.0
    %1189 = vmatprep.subr.mxu0 0.0
    %1190 = vmatpush1.msra.mxu0 0.0
    %1191 = vmatprep.subr.mxu0 0.0
    %1192 = vmatpush1.msra.mxu0 0.0
    %1193 = vmatprep.subr.mxu0 0.0
    %1194 = vmatpush1.msra.mxu0 0.0
    %1195 = vmatprep.subr.mxu0 0.0
    %1196 = vmatpush1.msra.mxu0 0.0
    %1197 = vmatprep.subr.mxu0 0.0
    %1198 = vmatpush1.msra.mxu0 0.0
    %1199 = vmatprep.subr.mxu0 0.0
    %1200 = vmatpush1.msra.mxu0 0.0
    %1201 = vmatprep.subr.mxu0 0.0
    %1202 = vmatpush1.msra.mxu0 0.0
    %1203 = vmatprep.subr.mxu0 0.0
    %1204 = vmatpush1.msra.mxu0 0.0
    %1205 = vmatprep.subr.mxu0 0.0
    %1206 = vmatpush1.msra.mxu0 0.0
    %1207 = vmatprep.subr.mxu0 0.0
    %1208 = vmatpush1.msra.mxu0 0.0
    %1209 = vmatprep.subr.mxu0 0.0
    %1210 = vmatpush1.msra.mxu0 0.0
    %1211 = vmatprep.subr.mxu0 0.0
    %1212 = vmatpush1.msra.mxu0 0.0
    %1213 = vmatprep.subr.mxu0 0.0
    %1214 = vmatpush1.msra.mxu0 0.0
    %1215 = vmatprep.subr.mxu0 0.0
    %1216 = vmatpush1.msra.mxu0 0.0
    %1217 = vmatprep.subr.mxu0 0.0
    %1218 = vmatpush1.msra.mxu0 0.0
    %1219 = vmatprep.mubr.f32.mxu0 0.0
    %1220 = vmatmul.mubr.f32.gmra.mrb[0].mxu0 %v1130
    %v1221 = vpop.f32.mrb[0].mxu0
    %v1222 = vadd.f32 %v1153, %v1221
    %v1223 = vpop.f32.mrb[0].mxu0
    %1224 = vmatprep.mubr.f32.mxu0 0.0
    %1225 = vmatmul.mubr.f32.gmra.mrb[0].mxu0 %v1131
    %v1226 = vpop.f32.mrb[0].mxu0
    %v1227 = vadd.f32 %v1153, %v1226
    %v1228 = vpop.f32.mrb[0].mxu0
    %1229 = vdwg.mxu0
    %v1230 = vmax.f32 %v1222, 0.0
    %v1231 = vmax.f32 %v1227, 0.0
    %v1232 = vld [vmem:[#allocation28] sm:$0xff]
    %v1233 = vld [vmem:[#allocation28 + $0x8] sm:$0xff]
    %v1234 = vld [vmem:[#allocation28 + $0x10] sm:$0xff]
    %v1235 = vld [vmem:[#allocation28 + $0x18] sm:$0xff]
    %v1236 = vld [vmem:[#allocation28 + $0x20] sm:$0xff]
    %v1237 = vld [vmem:[#allocation28 + $0x28] sm:$0xff]
    %v1238 = vld [vmem:[#allocation28 + $0x30] sm:$0xff]
    %v1239 = vld [vmem:[#allocation28 + $0x38] sm:$0xff]
    %v1240 = vld [vmem:[#allocation28 + $0x40] sm:$0xff]
    %v1241 = vld [vmem:[#allocation28 + $0x48] sm:$0xff]
    %v1242 = vld [vmem:[#allocation28 + $0x50] sm:$0xff]
    %v1243 = vld [vmem:[#allocation28 + $0x58] sm:$0xff]
    %v1244 = vld [vmem:[#allocation28 + $0x60] sm:$0xff]
    %v1245 = vld [vmem:[#allocation28 + $0x68] sm:$0xff]
    %v1246 = vld [vmem:[#allocation28 + $0x70] sm:$0xff]
    %v1247 = vld [vmem:[#allocation28 + $0x78] sm:$0xff]
    %v1248 = vld [vmem:[#allocation30] sm:$0x1]
    %v1250 = vlaneseq
    %v1251 = vshrl.u32 %v1250, 7
    %v1252 = vsub.s32 0, %v1251
    %v1253 = vrot.slane %v1248, %v1252
    %1255 = vmatprep.subr.mxu0 0.0
    %1256 = vmatpush1.msra.mxu0 %v1232
    %1257 = vmatprep.subr.mxu0 0.0
    %1258 = vmatpush1.msra.mxu0 %v1233
    %1259 = vmatprep.subr.mxu0 0.0
    %1260 = vmatpush1.msra.mxu0 %v1234
    %1261 = vmatprep.subr.mxu0 0.0
    %1262 = vmatpush1.msra.mxu0 %v1235
    %1263 = vmatprep.subr.mxu0 0.0
    %1264 = vmatpush1.msra.mxu0 %v1236
    %1265 = vmatprep.subr.mxu0 0.0
    %1266 = vmatpush1.msra.mxu0 %v1237
    %1267 = vmatprep.subr.mxu0 0.0
    %1268 = vmatpush1.msra.mxu0 %v1238
    %1269 = vmatprep.subr.mxu0 0.0
    %1270 = vmatpush1.msra.mxu0 %v1239
    %1271 = vmatprep.subr.mxu0 0.0
    %1272 = vmatpush1.msra.mxu0 %v1240
    %1273 = vmatprep.subr.mxu0 0.0
    %1274 = vmatpush1.msra.mxu0 %v1241
    %1275 = vmatprep.subr.mxu0 0.0
    %1276 = vmatpush1.msra.mxu0 %v1242
    %1277 = vmatprep.subr.mxu0 0.0
    %1278 = vmatpush1.msra.mxu0 %v1243
    %1279 = vmatprep.subr.mxu0 0.0
    %1280 = vmatpush1.msra.mxu0 %v1244
    %1281 = vmatprep.subr.mxu0 0.0
    %1282 = vmatpush1.msra.mxu0 %v1245
    %1283 = vmatprep.subr.mxu0 0.0
    %1284 = vmatpush1.msra.mxu0 %v1246
    %1285 = vmatprep.subr.mxu0 0.0
    %1286 = vmatpush1.msra.mxu0 %v1247
    %1287 = vmatprep.subr.mxu0 0.0
    %1288 = vmatpush1.msra.mxu0 0.0
    %1289 = vmatprep.subr.mxu0 0.0
    %1290 = vmatpush1.msra.mxu0 0.0
    %1291 = vmatprep.subr.mxu0 0.0
    %1292 = vmatpush1.msra.mxu0 0.0
    %1293 = vmatprep.subr.mxu0 0.0
    %1294 = vmatpush1.msra.mxu0 0.0
    %1295 = vmatprep.subr.mxu0 0.0
    %1296 = vmatpush1.msra.mxu0 0.0
    %1297 = vmatprep.subr.mxu0 0.0
    %1298 = vmatpush1.msra.mxu0 0.0
    %1299 = vmatprep.subr.mxu0 0.0
    %1300 = vmatpush1.msra.mxu0 0.0
    %1301 = vmatprep.subr.mxu0 0.0
    %1302 = vmatpush1.msra.mxu0 0.0
    %1303 = vmatprep.subr.mxu0 0.0
    %1304 = vmatpush1.msra.mxu0 0.0
    %1305 = vmatprep.subr.mxu0 0.0
    %1306 = vmatpush1.msra.mxu0 0.0
    %1307 = vmatprep.subr.mxu0 0.0
    %1308 = vmatpush1.msra.mxu0 0.0
    %1309 = vmatprep.subr.mxu0 0.0
    %1310 = vmatpush1.msra.mxu0 0.0
    %1311 = vmatprep.subr.mxu0 0.0
    %1312 = vmatpush1.msra.mxu0 0.0
    %1313 = vmatprep.subr.mxu0 0.0
    %1314 = vmatpush1.msra.mxu0 0.0
    %1315 = vmatprep.subr.mxu0 0.0
    %1316 = vmatpush1.msra.mxu0 0.0
    %1317 = vmatprep.subr.mxu0 0.0
    %1318 = vmatpush1.msra.mxu0 0.0
    %1319 = vmatprep.mubr.f32.mxu0 0.0
    %1320 = vmatmul.mubr.f32.gmra.mrb[0].mxu0 %v1230
    %v1321 = vpop.f32.mrb[0].mxu0
    %v1322 = vadd.f32 %v1253, %v1321
    %v1323 = vpop.f32.mrb[0].mxu0
    %1324 = vmatprep.mubr.f32.mxu0 0.0
    %1325 = vmatmul.mubr.f32.gmra.mrb[0].mxu0 %v1231
    %v1326 = vpop.f32.mrb[0].mxu0
    %v1327 = vadd.f32 %v1253, %v1326
    %v1328 = vpop.f32.mrb[0].mxu0
    %1329 = vdwg.mxu0
    %v1330 = vadd.f32 %v1322, %v556
    %v1331 = vadd.f32 %v1327, %v561
    %1332 = vmatprep.subr.mxu0 0.0
    %1333 = vmatpush1.msra.mxu0 %v1330
    %1334 = vmatprep.subr.mxu0 0.0
    %1335 = vmatpush1.msra.mxu0 %v1331
    %1336 = vmatprep.subr.mxu0 0.0
    %1337 = vmatpush1.msra.mxu0 0.0
    %1338 = vmatprep.subr.mxu0 0.0
    %1339 = vmatpush1.msra.mxu0 0.0
    %1340 = vmatprep.subr.mxu0 0.0
    %1341 = vmatpush1.msra.mxu0 0.0
    %1342 = vmatprep.subr.mxu0 0.0
    %1343 = vmatpush1.msra.mxu0 0.0
    %1344 = vmatprep.subr.mxu0 0.0
    %1345 = vmatpush1.msra.mxu0 0.0
    %1346 = vmatprep.subr.mxu0 0.0
    %1347 = vmatpush1.msra.mxu0 0.0
    %1348 = vmatprep.subr.mxu0 0.0
    %1349 = vmatpush1.msra.mxu0 0.0
    %1350 = vmatprep.subr.mxu0 0.0
    %1351 = vmatpush1.msra.mxu0 0.0
    %1352 = vmatprep.subr.mxu0 0.0
    %1353 = vmatpush1.msra.mxu0 0.0
    %1354 = vmatprep.subr.mxu0 0.0
    %1355 = vmatpush1.msra.mxu0 0.0
    %1356 = vmatprep.subr.mxu0 0.0
    %1357 = vmatpush1.msra.mxu0 0.0
    %1358 = vmatprep.subr.mxu0 0.0
    %1359 = vmatpush1.msra.mxu0 0.0
    %1360 = vmatprep.subr.mxu0 0.0
    %1361 = vmatpush1.msra.mxu0 0.0
    %1362 = vmatprep.subr.mxu0 0.0
    %1363 = vmatpush1.msra.mxu0 0.0
    %1364 = vmatprep.subr.mxu0 0.0
    %1365 = vmatpush1.msra.mxu0 0.0
    %1366 = vmatprep.subr.mxu0 0.0
    %1367 = vmatpush1.msra.mxu0 0.0
    %1368 = vmatprep.subr.mxu0 0.0
    %1369 = vmatpush1.msra.mxu0 0.0
    %1370 = vmatprep.subr.mxu0 0.0
    %1371 = vmatpush1.msra.mxu0 0.0
    %1372 = vmatprep.subr.mxu0 0.0
    %1373 = vmatpush1.msra.mxu0 0.0
    %1374 = vmatprep.subr.mxu0 0.0
    %1375 = vmatpush1.msra.mxu0 0.0
    %1376 = vmatprep.subr.mxu0 0.0
    %1377 = vmatpush1.msra.mxu0 0.0
    %1378 = vmatprep.subr.mxu0 0.0
    %1379 = vmatpush1.msra.mxu0 0.0
    %1380 = vmatprep.subr.mxu0 0.0
    %1381 = vmatpush1.msra.mxu0 0.0
    %1382 = vmatprep.subr.mxu0 0.0
    %1383 = vmatpush1.msra.mxu0 0.0
    %1384 = vmatprep.subr.mxu0 0.0
    %1385 = vmatpush1.msra.mxu0 0.0
    %1386 = vmatprep.subr.mxu0 0.0
    %1387 = vmatpush1.msra.mxu0 0.0
    %1388 = vmatprep.subr.mxu0 0.0
    %1389 = vmatpush1.msra.mxu0 0.0
    %1390 = vmatprep.subr.mxu0 0.0
    %1391 = vmatpush1.msra.mxu0 0.0
    %1392 = vmatprep.subr.mxu0 0.0
    %1393 = vmatpush1.msra.mxu0 0.0
    %1394 = vmatprep.subr.mxu0 0.0
    %1395 = vmatpush1.msra.mxu0 0.0
    %1396 = vmatprep.mubr.f32.mxu0 0.0
    %1397 = vmatmul.mubr.f32.gmra.mrb[0].mxu0 %v598
    %v1398 = vpop.f32.mrb[0].mxu0
    %v1399 = vadd.f32 0.0, %v1398
    %v1400 = vpop.f32.mrb[0].mxu0
    %1401 = vdwg.mxu0
    %v1402 = vld [vmem:[#allocation31] sm:$0xff]
    %v1403 = vmul.f32 %v1402, %v1399
    %s1404 = sld [smem:[#allocation3]]
    %v1405 = vstv %s1404
    %v1406 = vmul.f32 %v1405, %v1330
    %v1407 = vmul.f32 %v1405, %v1331
    %1408 = vmatprep.subr.mxu0 0.0
    %1409 = vmatpush1.msra.mxu0 %v1403
    %1410 = vmatprep.subr.mxu0 0.0
    %1411 = vmatpush1.msra.mxu0 0.0
    %1412 = vmatprep.subr.mxu0 0.0
    %1413 = vmatpush1.msra.mxu0 0.0
    %1414 = vmatprep.subr.mxu0 0.0
    %1415 = vmatpush1.msra.mxu0 0.0
    %1416 = vmatprep.subr.mxu0 0.0
    %1417 = vmatpush1.msra.mxu0 0.0
    %1418 = vmatprep.subr.mxu0 0.0
    %1419 = vmatpush1.msra.mxu0 0.0
    %1420 = vmatprep.subr.mxu0 0.0
    %1421 = vmatpush1.msra.mxu0 0.0
    %1422 = vmatprep.subr.mxu0 0.0
    %1423 = vmatpush1.msra.mxu0 0.0
    %1424 = vmatprep.subr.mxu0 0.0
    %1425 = vmatpush1.msra.mxu0 0.0
    %1426 = vmatprep.subr.mxu0 0.0
    %1427 = vmatpush1.msra.mxu0 0.0
    %1428 = vmatprep.subr.mxu0 0.0
    %1429 = vmatpush1.msra.mxu0 0.0
    %1430 = vmatprep.subr.mxu0 0.0
    %1431 = vmatpush1.msra.mxu0 0.0
    %1432 = vmatprep.subr.mxu0 0.0
    %1433 = vmatpush1.msra.mxu0 0.0
    %1434 = vmatprep.subr.mxu0 0.0
    %1435 = vmatpush1.msra.mxu0 0.0
    %1436 = vmatprep.subr.mxu0 0.0
    %1437 = vmatpush1.msra.mxu0 0.0
    %1438 = vmatprep.subr.mxu0 0.0
    %1439 = vmatpush1.msra.mxu0 0.0
    %1440 = vmatprep.subr.mxu0 0.0
    %1441 = vmatpush1.msra.mxu0 0.0
    %1442 = vmatprep.subr.mxu0 0.0
    %1443 = vmatpush1.msra.mxu0 0.0
    %1444 = vmatprep.subr.mxu0 0.0
    %1445 = vmatpush1.msra.mxu0 0.0
    %1446 = vmatprep.subr.mxu0 0.0
    %1447 = vmatpush1.msra.mxu0 0.0
    %1448 = vmatprep.subr.mxu0 0.0
    %1449 = vmatpush1.msra.mxu0 0.0
    %1450 = vmatprep.subr.mxu0 0.0
    %1451 = vmatpush1.msra.mxu0 0.0
    %1452 = vmatprep.subr.mxu0 0.0
    %1453 = vmatpush1.msra.mxu0 0.0
    %1454 = vmatprep.subr.mxu0 0.0
    %1455 = vmatpush1.msra.mxu0 0.0
    %1456 = vmatprep.subr.mxu0 0.0
    %1457 = vmatpush1.msra.mxu0 0.0
    %1458 = vmatprep.subr.mxu0 0.0
    %1459 = vmatpush1.msra.mxu0 0.0
    %1460 = vmatprep.subr.mxu0 0.0
    %1461 = vmatpush1.msra.mxu0 0.0
    %1462 = vmatprep.subr.mxu0 0.0
    %1463 = vmatpush1.msra.mxu0 0.0
    %1464 = vmatprep.subr.mxu0 0.0
    %1465 = vmatpush1.msra.mxu0 0.0
    %1466 = vmatprep.subr.mxu0 0.0
    %1467 = vmatpush1.msra.mxu0 0.0
    %1468 = vmatprep.subr.mxu0 0.0
    %1469 = vmatpush1.msra.mxu0 0.0
    %1470 = vmatprep.subr.mxu0 0.0
    %1471 = vmatpush1.msra.mxu0 0.0
    %1472 = vmatprep.mubr.f32.mxu0 0.0
    %1473 = vmatmul.mubr.f32.gmra.mrb[0].mxu0 %v678
    %v1474 = vpop.f32.mrb[0].mxu0
    %v1475 = vadd.f32 %v1406, %v1474
    %v1476 = vpop.f32.mrb[0].mxu0
    %1477 = vmatprep.mubr.f32.mxu0 0.0
    %1478 = vmatmul.mubr.f32.gmra.mrb[0].mxu0 %v681
    %v1479 = vpop.f32.mrb[0].mxu0
    %v1480 = vadd.f32 %v1407, %v1479
    %v1481 = vpop.f32.mrb[0].mxu0
    %1482 = vdwg.mxu0
    %v1483 = vld [vmem:[#allocation33] sm:$0xff]
    %v1484 = vld [vmem:[#allocation33 + $0x8] sm:$0xff]
    %v1485 = vld [vmem:[#allocation33 + $0x10] sm:$0xff]
    %v1486 = vld [vmem:[#allocation33 + $0x18] sm:$0xff]
    %v1487 = vld [vmem:[#allocation33 + $0x20] sm:$0xff]
    %v1488 = vld [vmem:[#allocation33 + $0x28] sm:$0xff]
    %v1489 = vld [vmem:[#allocation33 + $0x30] sm:$0xff]
    %v1490 = vld [vmem:[#allocation33 + $0x38] sm:$0xff]
    %v1491 = vld [vmem:[#allocation33 + $0x40] sm:$0xff]
    %v1492 = vld [vmem:[#allocation33 + $0x48] sm:$0xff]
    %v1493 = vld [vmem:[#allocation33 + $0x50] sm:$0xff]
    %v1494 = vld [vmem:[#allocation33 + $0x58] sm:$0xff]
    %v1495 = vld [vmem:[#allocation33 + $0x60] sm:$0xff]
    %v1496 = vld [vmem:[#allocation33 + $0x68] sm:$0xff]
    %v1497 = vld [vmem:[#allocation33 + $0x70] sm:$0xff]
    %v1498 = vld [vmem:[#allocation33 + $0x78] sm:$0xff]
    %1499 = vmatprep.subr.mxu0 0.0
    %1500 = vmatpush1.msra.mxu0 %v1483
    %1501 = vmatprep.subr.mxu0 0.0
    %1502 = vmatpush1.msra.mxu0 %v1484
    %1503 = vmatprep.subr.mxu0 0.0
    %1504 = vmatpush1.msra.mxu0 %v1485
    %1505 = vmatprep.subr.mxu0 0.0
    %1506 = vmatpush1.msra.mxu0 %v1486
    %1507 = vmatprep.subr.mxu0 0.0
    %1508 = vmatpush1.msra.mxu0 %v1487
    %1509 = vmatprep.subr.mxu0 0.0
    %1510 = vmatpush1.msra.mxu0 %v1488
    %1511 = vmatprep.subr.mxu0 0.0
    %1512 = vmatpush1.msra.mxu0 %v1489
    %1513 = vmatprep.subr.mxu0 0.0
    %1514 = vmatpush1.msra.mxu0 %v1490
    %1515 = vmatprep.subr.mxu0 0.0
    %1516 = vmatpush1.msra.mxu0 %v1491
    %1517 = vmatprep.subr.mxu0 0.0
    %1518 = vmatpush1.msra.mxu0 %v1492
    %1519 = vmatprep.subr.mxu0 0.0
    %1520 = vmatpush1.msra.mxu0 %v1493
    %1521 = vmatprep.subr.mxu0 0.0
    %1522 = vmatpush1.msra.mxu0 %v1494
    %1523 = vmatprep.subr.mxu0 0.0
    %1524 = vmatpush1.msra.mxu0 %v1495
    %1525 = vmatprep.subr.mxu0 0.0
    %1526 = vmatpush1.msra.mxu0 %v1496
    %1527 = vmatprep.subr.mxu0 0.0
    %1528 = vmatpush1.msra.mxu0 %v1497
    %1529 = vmatprep.subr.mxu0 0.0
    %1530 = vmatpush1.msra.mxu0 %v1498
    %1531 = vmatprep.subr.mxu0 0.0
    %1532 = vmatpush1.msra.mxu0 0.0
    %1533 = vmatprep.subr.mxu0 0.0
    %1534 = vmatpush1.msra.mxu0 0.0
    %1535 = vmatprep.subr.mxu0 0.0
    %1536 = vmatpush1.msra.mxu0 0.0
    %1537 = vmatprep.subr.mxu0 0.0
    %1538 = vmatpush1.msra.mxu0 0.0
    %1539 = vmatprep.subr.mxu0 0.0
    %1540 = vmatpush1.msra.mxu0 0.0
    %1541 = vmatprep.subr.mxu0 0.0
    %1542 = vmatpush1.msra.mxu0 0.0
    %1543 = vmatprep.subr.mxu0 0.0
    %1544 = vmatpush1.msra.mxu0 0.0
    %1545 = vmatprep.subr.mxu0 0.0
    %1546 = vmatpush1.msra.mxu0 0.0
    %1547 = vmatprep.subr.mxu0 0.0
    %1548 = vmatpush1.msra.mxu0 0.0
    %1549 = vmatprep.subr.mxu0 0.0
    %1550 = vmatpush1.msra.mxu0 0.0
    %1551 = vmatprep.subr.mxu0 0.0
    %1552 = vmatpush1.msra.mxu0 0.0
    %1553 = vmatprep.subr.mxu0 0.0
    %1554 = vmatpush1.msra.mxu0 0.0
    %1555 = vmatprep.subr.mxu0 0.0
    %1556 = vmatpush1.msra.mxu0 0.0
    %1557 = vmatprep.subr.mxu0 0.0
    %1558 = vmatpush1.msra.mxu0 0.0
    %1559 = vmatprep.subr.mxu0 0.0
    %1560 = vmatpush1.msra.mxu0 0.0
    %1561 = vmatprep.subr.mxu0 0.0
    %1562 = vmatpush1.msra.mxu0 0.0
    %1563 = vmatprep.mubr.f32.mxu0 0.0
    %1564 = vmatmul.mubr.f32.gmra.mrb[0].mxu0 %v1475
    %v1565 = vpop.f32.mrb[0].mxu0
    %v1566 = vadd.f32 0.0, %v1565
    %v1567 = vpop.f32.mrb[0].mxu0
    %1568 = vmatprep.mubr.f32.mxu0 0.0
    %1569 = vmatmul.mubr.f32.gmra.mrb[0].mxu0 %v1480
    %v1570 = vpop.f32.mrb[0].mxu0
    %v1571 = vadd.f32 0.0, %v1570
    %v1572 = vpop.f32.mrb[0].mxu0
    %1573 = vdwg.mxu0
    %v1574 = vld [vmem:[#allocation34] sm:$0x1]
    %v1576 = vlaneseq
    %v1577 = vshrl.u32 %v1576, 7
    %v1578 = vsub.s32 0, %v1577
    %v1579 = vrot.slane %v1574, %v1578
    %1581 = vmatprep.subr.mxu0 0.0
    %1582 = vmatpush1.msra.mxu0 %v1566
    %1583 = vmatprep.subr.mxu0 0.0
    %1584 = vmatpush1.msra.mxu0 %v1571
    %1585 = vmatprep.subr.mxu0 0.0
    %1586 = vmatpush1.msra.mxu0 0.0
    %1587 = vmatprep.subr.mxu0 0.0
    %1588 = vmatpush1.msra.mxu0 0.0
    %1589 = vmatprep.subr.mxu0 0.0
    %1590 = vmatpush1.msra.mxu0 0.0
    %1591 = vmatprep.subr.mxu0 0.0
    %1592 = vmatpush1.msra.mxu0 0.0
    %1593 = vmatprep.subr.mxu0 0.0
    %1594 = vmatpush1.msra.mxu0 0.0
    %1595 = vmatprep.subr.mxu0 0.0
    %1596 = vmatpush1.msra.mxu0 0.0
    %1597 = vmatprep.subr.mxu0 0.0
    %1598 = vmatpush1.msra.mxu0 0.0
    %1599 = vmatprep.subr.mxu0 0.0
    %1600 = vmatpush1.msra.mxu0 0.0
    %1601 = vmatprep.subr.mxu0 0.0
    %1602 = vmatpush1.msra.mxu0 0.0
    %1603 = vmatprep.subr.mxu0 0.0
    %1604 = vmatpush1.msra.mxu0 0.0
    %1605 = vmatprep.subr.mxu0 0.0
    %1606 = vmatpush1.msra.mxu0 0.0
    %1607 = vmatprep.subr.mxu0 0.0
    %1608 = vmatpush1.msra.mxu0 0.0
    %1609 = vmatprep.subr.mxu0 0.0
    %1610 = vmatpush1.msra.mxu0 0.0
    %1611 = vmatprep.subr.mxu0 0.0
    %1612 = vmatpush1.msra.mxu0 0.0
    %1613 = vmatprep.subr.mxu0 0.0
    %1614 = vmatpush1.msra.mxu0 0.0
    %1615 = vmatprep.subr.mxu0 0.0
    %1616 = vmatpush1.msra.mxu0 0.0
    %1617 = vmatprep.subr.mxu0 0.0
    %1618 = vmatpush1.msra.mxu0 0.0
    %1619 = vmatprep.subr.mxu0 0.0
    %1620 = vmatpush1.msra.mxu0 0.0
    %1621 = vmatprep.subr.mxu0 0.0
    %1622 = vmatpush1.msra.mxu0 0.0
    %1623 = vmatprep.subr.mxu0 0.0
    %1624 = vmatpush1.msra.mxu0 0.0
    %1625 = vmatprep.subr.mxu0 0.0
    %1626 = vmatpush1.msra.mxu0 0.0
    %1627 = vmatprep.subr.mxu0 0.0
    %1628 = vmatpush1.msra.mxu0 0.0
    %1629 = vmatprep.subr.mxu0 0.0
    %1630 = vmatpush1.msra.mxu0 0.0
    %1631 = vmatprep.subr.mxu0 0.0
    %1632 = vmatpush1.msra.mxu0 0.0
    %1633 = vmatprep.subr.mxu0 0.0
    %1634 = vmatpush1.msra.mxu0 0.0
    %1635 = vmatprep.subr.mxu0 0.0
    %1636 = vmatpush1.msra.mxu0 0.0
    %1637 = vmatprep.subr.mxu0 0.0
    %1638 = vmatpush1.msra.mxu0 0.0
    %1639 = vmatprep.subr.mxu0 0.0
    %1640 = vmatpush1.msra.mxu0 0.0
    %1641 = vmatprep.subr.mxu0 0.0
    %1642 = vmatpush1.msra.mxu0 0.0
    %1643 = vmatprep.subr.mxu0 0.0
    %1644 = vmatpush1.msra.mxu0 0.0
    %1645 = vmatprep.mubr.f32.mxu0 0.0
    %1646 = vmatmul.mubr.f32.gmra.mrb[0].mxu0 %v857
    %v1647 = vpop.f32.mrb[0].mxu0
    %v1648 = vadd.f32 %v1579, %v1647
    %v1649 = vpop.f32.mrb[0].mxu0
    %1650 = vmatprep.mubr.f32.mxu0 0.0
    %1651 = vmatmul.mubr.f32.gmra.mrb[0].mxu0 %v860
    %v1652 = vpop.f32.mrb[0].mxu0
    %v1653 = vadd.f32 %v1579, %v1652
    %v1654 = vpop.f32.mrb[0].mxu0
    %1655 = vdwg.mxu0
    %v1656 = vmax.f32 %v1648, 0.0
    %v1657 = vmax.f32 %v1653, 0.0
    %v1658 = vld [vmem:[#allocation36] sm:$0xff]
    %v1659 = vld [vmem:[#allocation36 + $0x8] sm:$0xff]
    %v1660 = vld [vmem:[#allocation36 + $0x10] sm:$0xff]
    %v1661 = vld [vmem:[#allocation36 + $0x18] sm:$0xff]
    %v1662 = vld [vmem:[#allocation36 + $0x20] sm:$0xff]
    %v1663 = vld [vmem:[#allocation36 + $0x28] sm:$0xff]
    %v1664 = vld [vmem:[#allocation36 + $0x30] sm:$0xff]
    %v1665 = vld [vmem:[#allocation36 + $0x38] sm:$0xff]
    %v1666 = vld [vmem:[#allocation36 + $0x40] sm:$0xff]
    %v1667 = vld [vmem:[#allocation36 + $0x48] sm:$0xff]
    %v1668 = vld [vmem:[#allocation36 + $0x50] sm:$0xff]
    %v1669 = vld [vmem:[#allocation36 + $0x58] sm:$0xff]
    %v1670 = vld [vmem:[#allocation36 + $0x60] sm:$0xff]
    %v1671 = vld [vmem:[#allocation36 + $0x68] sm:$0xff]
    %v1672 = vld [vmem:[#allocation36 + $0x70] sm:$0xff]
    %v1673 = vld [vmem:[#allocation36 + $0x78] sm:$0xff]
    %v1674 = vld [vmem:[#allocation37] sm:$0xff]
    %v1675 = vld [vmem:[#allocation37 + $0x8] sm:$0xff]
    %v1676 = vld [vmem:[#allocation37 + $0x10] sm:$0xff]
    %v1677 = vld [vmem:[#allocation37 + $0x18] sm:$0xff]
    %v1678 = vld [vmem:[#allocation37 + $0x20] sm:$0xff]
    %v1679 = vld [vmem:[#allocation37 + $0x28] sm:$0xff]
    %v1680 = vld [vmem:[#allocation37 + $0x30] sm:$0xff]
    %v1681 = vld [vmem:[#allocation37 + $0x38] sm:$0xff]
    %v1682 = vld [vmem:[#allocation37 + $0x40] sm:$0xff]
    %v1683 = vld [vmem:[#allocation37 + $0x48] sm:$0xff]
    %v1684 = vld [vmem:[#allocation37 + $0x50] sm:$0xff]
    %v1685 = vld [vmem:[#allocation37 + $0x58] sm:$0xff]
    %v1686 = vld [vmem:[#allocation37 + $0x60] sm:$0xff]
    %v1687 = vld [vmem:[#allocation37 + $0x68] sm:$0xff]
    %v1688 = vld [vmem:[#allocation37 + $0x70] sm:$0xff]
    %v1689 = vld [vmem:[#allocation37 + $0x78] sm:$0xff]
    %1690 = vmatprep.subr.mxu0 0.0
    %1691 = vmatpush1.msra.mxu0 %v1674
    %1692 = vmatprep.subr.mxu0 0.0
    %1693 = vmatpush1.msra.mxu0 %v1675
    %1694 = vmatprep.subr.mxu0 0.0
    %1695 = vmatpush1.msra.mxu0 %v1676
    %1696 = vmatprep.subr.mxu0 0.0
    %1697 = vmatpush1.msra.mxu0 %v1677
    %1698 = vmatprep.subr.mxu0 0.0
    %1699 = vmatpush1.msra.mxu0 %v1678
    %1700 = vmatprep.subr.mxu0 0.0
    %1701 = vmatpush1.msra.mxu0 %v1679
    %1702 = vmatprep.subr.mxu0 0.0
    %1703 = vmatpush1.msra.mxu0 %v1680
    %1704 = vmatprep.subr.mxu0 0.0
    %1705 = vmatpush1.msra.mxu0 %v1681
    %1706 = vmatprep.subr.mxu0 0.0
    %1707 = vmatpush1.msra.mxu0 %v1682
    %1708 = vmatprep.subr.mxu0 0.0
    %1709 = vmatpush1.msra.mxu0 %v1683
    %1710 = vmatprep.subr.mxu0 0.0
    %1711 = vmatpush1.msra.mxu0 %v1684
    %1712 = vmatprep.subr.mxu0 0.0
    %1713 = vmatpush1.msra.mxu0 %v1685
    %1714 = vmatprep.subr.mxu0 0.0
    %1715 = vmatpush1.msra.mxu0 %v1686
    %1716 = vmatprep.subr.mxu0 0.0
    %1717 = vmatpush1.msra.mxu0 %v1687
    %1718 = vmatprep.subr.mxu0 0.0
    %1719 = vmatpush1.msra.mxu0 %v1688
    %1720 = vmatprep.subr.mxu0 0.0
    %1721 = vmatpush1.msra.mxu0 %v1689
    %1722 = vmatprep.subr.mxu0 0.0
    %1723 = vmatpush1.msra.mxu0 0.0
    %1724 = vmatprep.subr.mxu0 0.0
    %1725 = vmatpush1.msra.mxu0 0.0
    %1726 = vmatprep.subr.mxu0 0.0
    %1727 = vmatpush1.msra.mxu0 0.0
    %1728 = vmatprep.subr.mxu0 0.0
    %1729 = vmatpush1.msra.mxu0 0.0
    %1730 = vmatprep.subr.mxu0 0.0
    %1731 = vmatpush1.msra.mxu0 0.0
    %1732 = vmatprep.subr.mxu0 0.0
    %1733 = vmatpush1.msra.mxu0 0.0
    %1734 = vmatprep.subr.mxu0 0.0
    %1735 = vmatpush1.msra.mxu0 0.0
    %1736 = vmatprep.subr.mxu0 0.0
    %1737 = vmatpush1.msra.mxu0 0.0
    %1738 = vmatprep.subr.mxu0 0.0
    %1739 = vmatpush1.msra.mxu0 0.0
    %1740 = vmatprep.subr.mxu0 0.0
    %1741 = vmatpush1.msra.mxu0 0.0
    %1742 = vmatprep.subr.mxu0 0.0
    %1743 = vmatpush1.msra.mxu0 0.0
    %1744 = vmatprep.subr.mxu0 0.0
    %1745 = vmatpush1.msra.mxu0 0.0
    %1746 = vmatprep.subr.mxu0 0.0
    %1747 = vmatpush1.msra.mxu0 0.0
    %1748 = vmatprep.subr.mxu0 0.0
    %1749 = vmatpush1.msra.mxu0 0.0
    %1750 = vmatprep.subr.mxu0 0.0
    %1751 = vmatpush1.msra.mxu0 0.0
    %1752 = vmatprep.subr.mxu0 0.0
    %1753 = vmatpush1.msra.mxu0 0.0
    %1754 = vmatprep.mubr.f32.mxu0 0.0
    %1755 = vmatmul.mubr.f32.gmra.mrb[0].mxu0 %v1656
    %v1756 = vpop.f32.mrb[0].mxu0
    %v1757 = vadd.f32 0.0, %v1756
    %v1758 = vpop.f32.mrb[0].mxu0
    %1759 = vmatprep.mubr.f32.mxu0 0.0
    %1760 = vmatmul.mubr.f32.gmra.mrb[0].mxu0 %v1657
    %v1761 = vpop.f32.mrb[0].mxu0
    %v1762 = vadd.f32 0.0, %v1761
    %v1763 = vpop.f32.mrb[0].mxu0
    %1764 = vdwg.mxu0
    %1765 = vmatprep.subr.mxu0 0.0
    %1766 = vmatpush1.msra.mxu0 %v1658
    %1767 = vmatprep.subr.mxu0 0.0
    %1768 = vmatpush1.msra.mxu0 %v1659
    %1769 = vmatprep.subr.mxu0 0.0
    %1770 = vmatpush1.msra.mxu0 %v1660
    %1771 = vmatprep.subr.mxu0 0.0
    %1772 = vmatpush1.msra.mxu0 %v1661
    %1773 = vmatprep.subr.mxu0 0.0
    %1774 = vmatpush1.msra.mxu0 %v1662
    %1775 = vmatprep.subr.mxu0 0.0
    %1776 = vmatpush1.msra.mxu0 %v1663
    %1777 = vmatprep.subr.mxu0 0.0
    %1778 = vmatpush1.msra.mxu0 %v1664
    %1779 = vmatprep.subr.mxu0 0.0
    %1780 = vmatpush1.msra.mxu0 %v1665
    %1781 = vmatprep.subr.mxu0 0.0
    %1782 = vmatpush1.msra.mxu0 %v1666
    %1783 = vmatprep.subr.mxu0 0.0
    %1784 = vmatpush1.msra.mxu0 %v1667
    %1785 = vmatprep.subr.mxu0 0.0
    %1786 = vmatpush1.msra.mxu0 %v1668
    %1787 = vmatprep.subr.mxu0 0.0
    %1788 = vmatpush1.msra.mxu0 %v1669
    %1789 = vmatprep.subr.mxu0 0.0
    %1790 = vmatpush1.msra.mxu0 %v1670
    %1791 = vmatprep.subr.mxu0 0.0
    %1792 = vmatpush1.msra.mxu0 %v1671
    %1793 = vmatprep.subr.mxu0 0.0
    %1794 = vmatpush1.msra.mxu0 %v1672
    %1795 = vmatprep.subr.mxu0 0.0
    %1796 = vmatpush1.msra.mxu0 %v1673
    %1797 = vmatprep.subr.mxu0 0.0
    %1798 = vmatpush1.msra.mxu0 0.0
    %1799 = vmatprep.subr.mxu0 0.0
    %1800 = vmatpush1.msra.mxu0 0.0
    %1801 = vmatprep.subr.mxu0 0.0
    %1802 = vmatpush1.msra.mxu0 0.0
    %1803 = vmatprep.subr.mxu0 0.0
    %1804 = vmatpush1.msra.mxu0 0.0
    %1805 = vmatprep.subr.mxu0 0.0
    %1806 = vmatpush1.msra.mxu0 0.0
    %1807 = vmatprep.subr.mxu0 0.0
    %1808 = vmatpush1.msra.mxu0 0.0
    %1809 = vmatprep.subr.mxu0 0.0
    %1810 = vmatpush1.msra.mxu0 0.0
    %1811 = vmatprep.subr.mxu0 0.0
    %1812 = vmatpush1.msra.mxu0 0.0
    %1813 = vmatprep.subr.mxu0 0.0
    %1814 = vmatpush1.msra.mxu0 0.0
    %1815 = vmatprep.subr.mxu0 0.0
    %1816 = vmatpush1.msra.mxu0 0.0
    %1817 = vmatprep.subr.mxu0 0.0
    %1818 = vmatpush1.msra.mxu0 0.0
    %1819 = vmatprep.subr.mxu0 0.0
    %1820 = vmatpush1.msra.mxu0 0.0
    %1821 = vmatprep.subr.mxu0 0.0
    %1822 = vmatpush1.msra.mxu0 0.0
    %1823 = vmatprep.subr.mxu0 0.0
    %1824 = vmatpush1.msra.mxu0 0.0
    %1825 = vmatprep.subr.mxu0 0.0
    %1826 = vmatpush1.msra.mxu0 0.0
    %1827 = vmatprep.subr.mxu0 0.0
    %1828 = vmatpush1.msra.mxu0 0.0
    %1829 = vmatprep.mubr.f32.mxu0 0.0
    %1830 = vmatmul.mubr.f32.gmra.mrb[0].mxu0 %v1330
    %v1831 = vpop.f32.mrb[0].mxu0
    %v1832 = vadd.f32 %v1757, %v1831
    %v1833 = vpop.f32.mrb[0].mxu0
    %1834 = vmatprep.mubr.f32.mxu0 0.0
    %1835 = vmatmul.mubr.f32.gmra.mrb[0].mxu0 %v1331
    %v1836 = vpop.f32.mrb[0].mxu0
    %v1837 = vadd.f32 %v1762, %v1836
    %v1838 = vpop.f32.mrb[0].mxu0
    %1839 = vdwg.mxu0
    %v1840 = vld [vmem:[#allocation39] sm:$0x1]
    %v1842 = vlaneseq
    %v1843 = vshrl.u32 %v1842, 7
    %v1844 = vsub.s32 0, %v1843
    %v1845 = vrot.slane %v1840, %v1844
    %v1847 = vadd.f32 %v1832, %v1845
    %v1848 = vadd.f32 %v1837, %v1845
    %v1849 = vmax.f32 %v1847, 0.0
    %v1850 = vmax.f32 %v1848, 0.0
    %v1851 = vld [vmem:[#allocation40] sm:$0xff]
    %v1852 = vld [vmem:[#allocation40 + $0x8] sm:$0xff]
    %v1853 = vld [vmem:[#allocation40 + $0x10] sm:$0xff]
    %v1854 = vld [vmem:[#allocation40 + $0x18] sm:$0xff]
    %v1855 = vld [vmem:[#allocation40 + $0x20] sm:$0xff]
    %v1856 = vld [vmem:[#allocation40 + $0x28] sm:$0xff]
    %v1857 = vld [vmem:[#allocation40 + $0x30] sm:$0xff]
    %v1858 = vld [vmem:[#allocation40 + $0x38] sm:$0xff]
    %v1859 = vld [vmem:[#allocation40 + $0x40] sm:$0xff]
    %v1860 = vld [vmem:[#allocation40 + $0x48] sm:$0xff]
    %v1861 = vld [vmem:[#allocation40 + $0x50] sm:$0xff]
    %v1862 = vld [vmem:[#allocation40 + $0x58] sm:$0xff]
    %v1863 = vld [vmem:[#allocation40 + $0x60] sm:$0xff]
    %v1864 = vld [vmem:[#allocation40 + $0x68] sm:$0xff]
    %v1865 = vld [vmem:[#allocation40 + $0x70] sm:$0xff]
    %v1866 = vld [vmem:[#allocation40 + $0x78] sm:$0xff]
    %v1867 = vld [vmem:[#allocation42] sm:$0x1]
    %v1869 = vlaneseq
    %v1870 = vshrl.u32 %v1869, 7
    %v1871 = vsub.s32 0, %v1870
    %v1872 = vrot.slane %v1867, %v1871
    %1874 = vmatprep.subr.mxu0 0.0
    %1875 = vmatpush1.msra.mxu0 %v1851
    %1876 = vmatprep.subr.mxu0 0.0
    %1877 = vmatpush1.msra.mxu0 %v1852
    %1878 = vmatprep.subr.mxu0 0.0
    %1879 = vmatpush1.msra.mxu0 %v1853
    %1880 = vmatprep.subr.mxu0 0.0
    %1881 = vmatpush1.msra.mxu0 %v1854
    %1882 = vmatprep.subr.mxu0 0.0
    %1883 = vmatpush1.msra.mxu0 %v1855
    %1884 = vmatprep.subr.mxu0 0.0
    %1885 = vmatpush1.msra.mxu0 %v1856
    %1886 = vmatprep.subr.mxu0 0.0
    %1887 = vmatpush1.msra.mxu0 %v1857
    %1888 = vmatprep.subr.mxu0 0.0
    %1889 = vmatpush1.msra.mxu0 %v1858
    %1890 = vmatprep.subr.mxu0 0.0
    %1891 = vmatpush1.msra.mxu0 %v1859
    %1892 = vmatprep.subr.mxu0 0.0
    %1893 = vmatpush1.msra.mxu0 %v1860
    %1894 = vmatprep.subr.mxu0 0.0
    %1895 = vmatpush1.msra.mxu0 %v1861
    %1896 = vmatprep.subr.mxu0 0.0
    %1897 = vmatpush1.msra.mxu0 %v1862
    %1898 = vmatprep.subr.mxu0 0.0
    %1899 = vmatpush1.msra.mxu0 %v1863
    %1900 = vmatprep.subr.mxu0 0.0
    %1901 = vmatpush1.msra.mxu0 %v1864
    %1902 = vmatprep.subr.mxu0 0.0
    %1903 = vmatpush1.msra.mxu0 %v1865
    %1904 = vmatprep.subr.mxu0 0.0
    %1905 = vmatpush1.msra.mxu0 %v1866
    %1906 = vmatprep.subr.mxu0 0.0
    %1907 = vmatpush1.msra.mxu0 0.0
    %1908 = vmatprep.subr.mxu0 0.0
    %1909 = vmatpush1.msra.mxu0 0.0
    %1910 = vmatprep.subr.mxu0 0.0
    %1911 = vmatpush1.msra.mxu0 0.0
    %1912 = vmatprep.subr.mxu0 0.0
    %1913 = vmatpush1.msra.mxu0 0.0
    %1914 = vmatprep.subr.mxu0 0.0
    %1915 = vmatpush1.msra.mxu0 0.0
    %1916 = vmatprep.subr.mxu0 0.0
    %1917 = vmatpush1.msra.mxu0 0.0
    %1918 = vmatprep.subr.mxu0 0.0
    %1919 = vmatpush1.msra.mxu0 0.0
    %1920 = vmatprep.subr.mxu0 0.0
    %1921 = vmatpush1.msra.mxu0 0.0
    %1922 = vmatprep.subr.mxu0 0.0
    %1923 = vmatpush1.msra.mxu0 0.0
    %1924 = vmatprep.subr.mxu0 0.0
    %1925 = vmatpush1.msra.mxu0 0.0
    %1926 = vmatprep.subr.mxu0 0.0
    %1927 = vmatpush1.msra.mxu0 0.0
    %1928 = vmatprep.subr.mxu0 0.0
    %1929 = vmatpush1.msra.mxu0 0.0
    %1930 = vmatprep.subr.mxu0 0.0
    %1931 = vmatpush1.msra.mxu0 0.0
    %1932 = vmatprep.subr.mxu0 0.0
    %1933 = vmatpush1.msra.mxu0 0.0
    %1934 = vmatprep.subr.mxu0 0.0
    %1935 = vmatpush1.msra.mxu0 0.0
    %1936 = vmatprep.subr.mxu0 0.0
    %1937 = vmatpush1.msra.mxu0 0.0
    %1938 = vmatprep.mubr.f32.mxu0 0.0
    %1939 = vmatmul.mubr.f32.gmra.mrb[0].mxu0 %v1849
    %v1940 = vpop.f32.mrb[0].mxu0
    %v1941 = vadd.f32 %v1872, %v1940
    %v1942 = vpop.f32.mrb[0].mxu0
    %1943 = vmatprep.mubr.f32.mxu0 0.0
    %1944 = vmatmul.mubr.f32.gmra.mrb[0].mxu0 %v1850
    %v1945 = vpop.f32.mrb[0].mxu0
    %v1946 = vadd.f32 %v1872, %v1945
    %v1947 = vpop.f32.mrb[0].mxu0
    %1948 = vdwg.mxu0
    %v1949 = vmax.f32 %v1941, 0.0
    %v1950 = vmax.f32 %v1946, 0.0
    %v1951 = vld [vmem:[#allocation43] sm:$0xff]
    %v1952 = vld [vmem:[#allocation43 + $0x8] sm:$0xff]
    %v1953 = vld [vmem:[#allocation43 + $0x10] sm:$0xff]
    %v1954 = vld [vmem:[#allocation43 + $0x18] sm:$0xff]
    %v1955 = vld [vmem:[#allocation43 + $0x20] sm:$0xff]
    %v1956 = vld [vmem:[#allocation43 + $0x28] sm:$0xff]
    %v1957 = vld [vmem:[#allocation43 + $0x30] sm:$0xff]
    %v1958 = vld [vmem:[#allocation43 + $0x38] sm:$0xff]
    %v1959 = vld [vmem:[#allocation43 + $0x40] sm:$0xff]
    %v1960 = vld [vmem:[#allocation43 + $0x48] sm:$0xff]
    %v1961 = vld [vmem:[#allocation43 + $0x50] sm:$0xff]
    %v1962 = vld [vmem:[#allocation43 + $0x58] sm:$0xff]
    %v1963 = vld [vmem:[#allocation43 + $0x60] sm:$0xff]
    %v1964 = vld [vmem:[#allocation43 + $0x68] sm:$0xff]
    %v1965 = vld [vmem:[#allocation43 + $0x70] sm:$0xff]
    %v1966 = vld [vmem:[#allocation43 + $0x78] sm:$0xff]
    %v1967 = vld [vmem:[#allocation45] sm:$0x1]
    %v1969 = vlaneseq
    %v1970 = vshrl.u32 %v1969, 7
    %v1971 = vsub.s32 0, %v1970
    %v1972 = vrot.slane %v1967, %v1971
    %1974 = vmatprep.subr.mxu0 0.0
    %1975 = vmatpush1.msra.mxu0 %v1951
    %1976 = vmatprep.subr.mxu0 0.0
    %1977 = vmatpush1.msra.mxu0 %v1952
    %1978 = vmatprep.subr.mxu0 0.0
    %1979 = vmatpush1.msra.mxu0 %v1953
    %1980 = vmatprep.subr.mxu0 0.0
    %1981 = vmatpush1.msra.mxu0 %v1954
    %1982 = vmatprep.subr.mxu0 0.0
    %1983 = vmatpush1.msra.mxu0 %v1955
    %1984 = vmatprep.subr.mxu0 0.0
    %1985 = vmatpush1.msra.mxu0 %v1956
    %1986 = vmatprep.subr.mxu0 0.0
    %1987 = vmatpush1.msra.mxu0 %v1957
    %1988 = vmatprep.subr.mxu0 0.0
    %1989 = vmatpush1.msra.mxu0 %v1958
    %1990 = vmatprep.subr.mxu0 0.0
    %1991 = vmatpush1.msra.mxu0 %v1959
    %1992 = vmatprep.subr.mxu0 0.0
    %1993 = vmatpush1.msra.mxu0 %v1960
    %1994 = vmatprep.subr.mxu0 0.0
    %1995 = vmatpush1.msra.mxu0 %v1961
    %1996 = vmatprep.subr.mxu0 0.0
    %1997 = vmatpush1.msra.mxu0 %v1962
    %1998 = vmatprep.subr.mxu0 0.0
    %1999 = vmatpush1.msra.mxu0 %v1963
    %2000 = vmatprep.subr.mxu0 0.0
    %2001 = vmatpush1.msra.mxu0 %v1964
    %2002 = vmatprep.subr.mxu0 0.0
    %2003 = vmatpush1.msra.mxu0 %v1965
    %2004 = vmatprep.subr.mxu0 0.0
    %2005 = vmatpush1.msra.mxu0 %v1966
    %2006 = vmatprep.subr.mxu0 0.0
    %2007 = vmatpush1.msra.mxu0 0.0
    %2008 = vmatprep.subr.mxu0 0.0
    %2009 = vmatpush1.msra.mxu0 0.0
    %2010 = vmatprep.subr.mxu0 0.0
    %2011 = vmatpush1.msra.mxu0 0.0
    %2012 = vmatprep.subr.mxu0 0.0
    %2013 = vmatpush1.msra.mxu0 0.0
    %2014 = vmatprep.subr.mxu0 0.0
    %2015 = vmatpush1.msra.mxu0 0.0
    %2016 = vmatprep.subr.mxu0 0.0
    %2017 = vmatpush1.msra.mxu0 0.0
    %2018 = vmatprep.subr.mxu0 0.0
    %2019 = vmatpush1.msra.mxu0 0.0
    %2020 = vmatprep.subr.mxu0 0.0
    %2021 = vmatpush1.msra.mxu0 0.0
    %2022 = vmatprep.subr.mxu0 0.0
    %2023 = vmatpush1.msra.mxu0 0.0
    %2024 = vmatprep.subr.mxu0 0.0
    %2025 = vmatpush1.msra.mxu0 0.0
    %2026 = vmatprep.subr.mxu0 0.0
    %2027 = vmatpush1.msra.mxu0 0.0
    %2028 = vmatprep.subr.mxu0 0.0
    %2029 = vmatpush1.msra.mxu0 0.0
    %2030 = vmatprep.subr.mxu0 0.0
    %2031 = vmatpush1.msra.mxu0 0.0
    %2032 = vmatprep.subr.mxu0 0.0
    %2033 = vmatpush1.msra.mxu0 0.0
    %2034 = vmatprep.subr.mxu0 0.0
    %2035 = vmatpush1.msra.mxu0 0.0
    %2036 = vmatprep.subr.mxu0 0.0
    %2037 = vmatpush1.msra.mxu0 0.0
    %2038 = vmatprep.mubr.f32.mxu0 0.0
    %2039 = vmatmul.mubr.f32.gmra.mrb[0].mxu0 %v1949
    %v2040 = vpop.f32.mrb[0].mxu0
    %v2041 = vadd.f32 %v1972, %v2040
    %v2042 = vpop.f32.mrb[0].mxu0
    %2043 = vmatprep.mubr.f32.mxu0 0.0
    %2044 = vmatmul.mubr.f32.gmra.mrb[0].mxu0 %v1950
    %v2045 = vpop.f32.mrb[0].mxu0
    %v2046 = vadd.f32 %v1972, %v2045
    %v2047 = vpop.f32.mrb[0].mxu0
    %2048 = vdwg.mxu0
    %v2049 = vadd.f32 %v2041, %v1330
    %v2050 = vadd.f32 %v2046, %v1331
    %v2051 = vld [vmem:[#allocation13] sm:$0xff]
    %v2052 = vld [vmem:[#allocation13 + $0x8] sm:$0xff]
    %v2053 = vld [vmem:[#allocation13 + $0x10] sm:$0xff]
    %v2054 = vld [vmem:[#allocation13 + $0x18] sm:$0xff]
    %v2055 = vld [vmem:[#allocation13 + $0x20] sm:$0xff]
    %v2056 = vld [vmem:[#allocation13 + $0x28] sm:$0xff]
    %v2057 = vld [vmem:[#allocation13 + $0x30] sm:$0xff]
    %v2058 = vld [vmem:[#allocation13 + $0x38] sm:$0xff]
    %v2059 = vld [vmem:[#allocation13 + $0x40] sm:$0xff]
    %v2060 = vld [vmem:[#allocation13 + $0x48] sm:$0xff]
    %v2061 = vld [vmem:[#allocation13 + $0x50] sm:$0xff]
    %v2062 = vld [vmem:[#allocation13 + $0x58] sm:$0xff]
    %v2063 = vld [vmem:[#allocation13 + $0x60] sm:$0xff]
    %v2064 = vld [vmem:[#allocation13 + $0x68] sm:$0xff]
    %v2065 = vld [vmem:[#allocation13 + $0x70] sm:$0xff]
    %v2066 = vld [vmem:[#allocation13 + $0x78] sm:$0xff]
    %v2067 = vld [vmem:[#allocation15] sm:$0x1]
    %v2069 = vlaneseq
    %v2070 = vshrl.u32 %v2069, 7
    %v2071 = vsub.s32 0, %v2070
    %v2072 = vrot.slane %v2067, %v2071
    %2074 = vmatprep.subr.mxu0 0.0
    %2075 = vmatpush1.msra.mxu0 %v2051
    %2076 = vmatprep.subr.mxu0 0.0
    %2077 = vmatpush1.msra.mxu0 %v2052
    %2078 = vmatprep.subr.mxu0 0.0
    %2079 = vmatpush1.msra.mxu0 %v2053
    %2080 = vmatprep.subr.mxu0 0.0
    %2081 = vmatpush1.msra.mxu0 %v2054
    %2082 = vmatprep.subr.mxu0 0.0
    %2083 = vmatpush1.msra.mxu0 %v2055
    %2084 = vmatprep.subr.mxu0 0.0
    %2085 = vmatpush1.msra.mxu0 %v2056
    %2086 = vmatprep.subr.mxu0 0.0
    %2087 = vmatpush1.msra.mxu0 %v2057
    %2088 = vmatprep.subr.mxu0 0.0
    %2089 = vmatpush1.msra.mxu0 %v2058
    %2090 = vmatprep.subr.mxu0 0.0
    %2091 = vmatpush1.msra.mxu0 %v2059
    %2092 = vmatprep.subr.mxu0 0.0
    %2093 = vmatpush1.msra.mxu0 %v2060
    %2094 = vmatprep.subr.mxu0 0.0
    %2095 = vmatpush1.msra.mxu0 %v2061
    %2096 = vmatprep.subr.mxu0 0.0
    %2097 = vmatpush1.msra.mxu0 %v2062
    %2098 = vmatprep.subr.mxu0 0.0
    %2099 = vmatpush1.msra.mxu0 %v2063
    %2100 = vmatprep.subr.mxu0 0.0
    %2101 = vmatpush1.msra.mxu0 %v2064
    %2102 = vmatprep.subr.mxu0 0.0
    %2103 = vmatpush1.msra.mxu0 %v2065
    %2104 = vmatprep.subr.mxu0 0.0
    %2105 = vmatpush1.msra.mxu0 %v2066
    %2106 = vmatprep.subr.mxu0 0.0
    %2107 = vmatpush1.msra.mxu0 0.0
    %2108 = vmatprep.subr.mxu0 0.0
    %2109 = vmatpush1.msra.mxu0 0.0
    %2110 = vmatprep.subr.mxu0 0.0
    %2111 = vmatpush1.msra.mxu0 0.0
    %2112 = vmatprep.subr.mxu0 0.0
    %2113 = vmatpush1.msra.mxu0 0.0
    %2114 = vmatprep.subr.mxu0 0.0
    %2115 = vmatpush1.msra.mxu0 0.0
    %2116 = vmatprep.subr.mxu0 0.0
    %2117 = vmatpush1.msra.mxu0 0.0
    %2118 = vmatprep.subr.mxu0 0.0
    %2119 = vmatpush1.msra.mxu0 0.0
    %2120 = vmatprep.subr.mxu0 0.0
    %2121 = vmatpush1.msra.mxu0 0.0
    %2122 = vmatprep.subr.mxu0 0.0
    %2123 = vmatpush1.msra.mxu0 0.0
    %2124 = vmatprep.subr.mxu0 0.0
    %2125 = vmatpush1.msra.mxu0 0.0
    %2126 = vmatprep.subr.mxu0 0.0
    %2127 = vmatpush1.msra.mxu0 0.0
    %2128 = vmatprep.subr.mxu0 0.0
    %2129 = vmatpush1.msra.mxu0 0.0
    %2130 = vmatprep.subr.mxu0 0.0
    %2131 = vmatpush1.msra.mxu0 0.0
    %2132 = vmatprep.subr.mxu0 0.0
    %2133 = vmatpush1.msra.mxu0 0.0
    %2134 = vmatprep.subr.mxu0 0.0
    %2135 = vmatpush1.msra.mxu0 0.0
    %2136 = vmatprep.subr.mxu0 0.0
    %2137 = vmatpush1.msra.mxu0 0.0
    %2138 = vmatprep.mubr.f32.mxu0 0.0
    %2139 = vmatmul.mubr.f32.gmra.mrb[0].mxu0 %v2049
    %v2140 = vpop.f32.mrb[0].mxu0
    %v2141 = vadd.f32 %v2072, %v2140
    %v2142 = vpop.f32.mrb[0].mxu0
    %2143 = vmatprep.mubr.f32.mxu0 0.0
    %2144 = vmatmul.mubr.f32.gmra.mrb[0].mxu0 %v2050
    %v2145 = vpop.f32.mrb[0].mxu0
    %v2146 = vadd.f32 %v2072, %v2145
    %v2147 = vpop.f32.mrb[0].mxu0
    %2148 = vdwg.mxu0
    %2149 = vst [vmem:[#allocation46] sm:$0xff] %v2141
    %2150 = vst [vmem:[#allocation46 + $0x8] sm:$0xff] %v2146
    // Predicated region
    $region226: #{tide_net_forward.1} parent=1 // pred_check
      _
    $region227: #{tide_net_forward.1} parent=1 // pred_check_branch
      %2152 = sbr.rel (0) target = $region229
    $region228: #{tide_net_forward.1} parent=1 // pred_region
      %s2154 = ssub.s32 256, 256
      %2155 = vsyncadd [#allocation6], %s2154
      %s2156 = sshll.u32 [#allocation46], 4
      %s2157 = int_to_ptr.vmem [resolvable:$true] %s2156
      %2162 = dma.vmem_to_hbm [thread:$0]  %s2157, 256, %s59, [#allocation6], 128, 128, 8
    $region229: #{tide_net_forward.1} parent=1 // pred_fallthru
      _
    // Predicated region
    $region230: #{tide_net_forward.1} parent=1 // pred_check
      _
    $region231: #{tide_net_forward.1} parent=1 // pred_check_branch
      %2164 = sbr.rel (0) target = $region233
    $region232: #{tide_net_forward.1} parent=1 // pred_region
      %2165 = dma.done [#allocation6], 256
    $region233: #{tide_net_forward.1} parent=1 // pred_fallthru
      _
    %2166 = vsyncpa [#allocation5], 1
    %2167 = vsyncpa [#allocation8], 1
    %2168 = vsyncpa [#allocation11], 1
    %2169 = vsyncpa [#allocation14], 1
    %2170 = vsyncpa [#allocation17], 1
    %2171 = vsyncpa [#allocation20], 1
    %2172 = vsyncpa [#allocation23], 1
    %2173 = vsyncpa [#allocation26], 1
    %2174 = vsyncpa [#allocation29], 1
    %2175 = vsyncpa [#allocation32], 1
    %2176 = vsyncpa [#allocation35], 1
    %2177 = vsyncpa [#allocation38], 1
    %2178 = vsyncpa [#allocation41], 1
    %2179 = vsyncpa [#allocation44], 1
    %2180 = vsyncpa [#allocation6], 1

</llo_original>
